<compile_context>
chip_gen: v6e
topology: v6e:2x2x1
jax: 0.10.0
libtpu: 0.0.40
codegen_flags: <defaults>
</compile_context>

<pallas_src>
import jax
import jax.numpy as jnp
from jax import lax
from jax.experimental import pallas as pl
from jax.experimental.pallas import tpu as pltpu


# ----------------------------- Pallas kernel ---------------------------------
def _bidir_lstm_kernel(x_ref, wxf_ref, wxb_ref, whh_ref, b_ref, h0_ref, c0_ref,
                       out_ref, hn_ref, cn_ref):
    T, B, twoH = out_ref.shape
    H = twoH // 2

    # ---- prologue: hoisted input projection for ALL T steps, both directions ----
    # Gate columns are already placed at their interleaved positions (zeros in the other
    # direction's slots), so the two directions combine with a plain add in the loop.
    x2d = x_ref[...]                                                     # [T*B, D]
    gxa = jnp.dot(x2d, wxf_ref[...],
                  preferred_element_type=jnp.float32) + b_ref[...]       # [T*B, 8H] fwd + bias
    gxb = jnp.dot(x2d, wxb_ref[...],
                  preferred_element_type=jnp.float32)                    # [T*B, 8H] bwd

    whh = whh_ref[...]                                                   # [2H, 8H] block-diag
    h_cat = h0_ref[...]                                                  # [B, 2H] = [h_fwd | h_bwd]
    c_cat = c0_ref[...]                                                  # [B, 2H]

    # ---- statically unrolled recurrence (T is small & fixed) ----
    for t in range(T):
        rt = T - 1 - t                                                   # reverse-dir time index
        gx = gxa[t * B:(t + 1) * B, :] + gxb[rt * B:(rt + 1) * B, :]     # [B, 8H]
        gates = gx + jnp.dot(h_cat, whh,
                             preferred_element_type=jnp.float32)         # [B, 8H]
        # interleaved layout: [i0 i1 | f0 f1 | g0 g1 | o0 o1], each gate = 64 lanes
        i_g = jax.nn.sigmoid(gates[:, 0 * H:2 * H])
        f_g = jax.nn.sigmoid(gates[:, 2 * H:4 * H])
        g_g = jnp.tanh(gates[:, 4 * H:6 * H])
        o_g = jax.nn.sigmoid(gates[:, 6 * H:8 * H])
        c_cat = f_g * c_cat + i_g * g_g                                  # both dirs at once
        h_cat = o_g * jnp.tanh(c_cat)
        # forward hidden -> time t, lanes [0:H); reverse hidden -> time rt, lanes [H:2H)
        out_ref[t, :, 0:H] = h_cat[:, 0:H]
        out_ref[rt, :, H:twoH] = h_cat[:, H:twoH]

    # final states, PyTorch layout [num_directions, B, H]
    hn_ref[0] = h_cat[:, 0:H]
    hn_ref[1] = h_cat[:, H:twoH]
    cn_ref[0] = c_cat[:, 0:H]
    cn_ref[1] = c_cat[:, H:twoH]


# ----------------------------- weight plumbing --------------------------------
def _interleave_gates(a, b, H):
    """a, b: [..., 4H] with per-direction gate-major columns (i,f,g,o).
    Returns [..., 8H] with columns [i_a i_b f_a f_b g_a g_b o_a o_b]."""
    lead = a.shape[:-1]
    a4 = a.reshape(lead + (4, H))
    b4 = b.reshape(lead + (4, H))
    return jnp.stack([a4, b4], axis=-2).reshape(lead + (8 * H,))


def init_params(key, vocab_size, latent_dim):
    """Deterministic parameter init matching nn.Embedding / nn.LSTM shapes."""
    H = latent_dim
    k_emb, k1, k2, k3, k4 = jax.random.split(key, 5)
    bound = 1.0 / jnp.sqrt(H)
    return {
        # nn.Embedding(vocab_size + 4, latent_dim): N(0, 1)
        "embedding": jax.random.normal(k_emb, (vocab_size + 4, H), jnp.float32),
        # nn.LSTM weights, stacked over the 2 directions, uniform(-1/sqrt(H), 1/sqrt(H))
        "w_ih": jax.random.uniform(k1, (2, 4 * H, H), jnp.float32, -bound, bound),
        "w_hh": jax.random.uniform(k2, (2, 4 * H, H), jnp.float32, -bound, bound),
        "b_ih": jax.random.uniform(k3, (2, 4 * H), jnp.float32, -bound, bound),
        "b_hh": jax.random.uniform(k4, (2, 4 * H), jnp.float32, -bound, bound),
    }


def nmt_decoder_la_forward(params, inputs, decoder_hidden_state, decoder_cell_state):
    """inputs: int32 [B, T]; h0/c0: float32 [2, B, H]. Returns (output, (h_n, c_n))."""
    B, T = inputs.shape
    D = params["embedding"].shape[1]
    H = params["w_hh"].shape[-1]

    # Embedding lookup (kept as XLA glue; padding_idx=None so no zeroing). Dropout is a
    # no-op for num_layers=1 (PyTorch only applies it between LSTM layers).
    emb = jnp.take(params["embedding"], inputs, axis=0)                  # [B, T, D]
    x2d = jnp.transpose(emb, (1, 0, 2)).reshape(T * B, D)                # time-major, flat

    wih_t = jnp.transpose(params["w_ih"], (0, 2, 1))                     # [2, D, 4H]
    whh_t = jnp.transpose(params["w_hh"], (0, 2, 1))                     # [2, H, 4H]
    bias = params["b_ih"] + params["b_hh"]                               # [2, 4H]
    z_dh = jnp.zeros_like(wih_t[0])
    z_hh = jnp.zeros_like(whh_t[0])

    # Input-projection weights with gate columns interleaved across directions; the other
    # direction's columns are zero so fwd/bwd contributions combine with a plain add.
    wx_f = _interleave_gates(wih_t[0], z_dh, H)                          # [D, 8H]
    wx_b = _interleave_gates(z_dh, wih_t[1], H)                          # [D, 8H]
    bias_all = _interleave_gates(bias[0][None, :], bias[1][None, :], H)  # [1, 8H]

    # Block-diagonal recurrent weight: [h_fwd | h_bwd] @ whh_blk computes both directions
    # in one 256-wide MXU pass per step.
    whh_blk = jnp.concatenate(
        [_interleave_gates(whh_t[0], z_hh, H),
         _interleave_gates(z_hh, whh_t[1], H)], axis=0)                  # [2H, 8H]

    h0_cat = jnp.concatenate(
        [decoder_hidden_state[0], decoder_hidden_state[1]], axis=-1)     # [B, 2H]
    c0_cat = jnp.concatenate(
        [decoder_cell_state[0], decoder_cell_state[1]], axis=-1)         # [B, 2H]

    vmem = pl.BlockSpec(memory_space=pltpu.MemorySpace.VMEM)
    out_tm, h_n, c_n = pl.pallas_call(
        _bidir_lstm_kernel,
        out_shape=(jax.ShapeDtypeStruct((T, B, 2 * H), jnp.float32),
                   jax.ShapeDtypeStruct((2, B, H), jnp.float32),
                   jax.ShapeDtypeStruct((2, B, H), jnp.float32)),
        in_specs=[vmem] * 7,
        out_specs=(vmem, vmem, vmem),
    )(x2d, wx_f, wx_b, whh_blk, bias_all, h0_cat, c0_cat)

    output = jnp.transpose(out_tm, (1, 0, 2))                            # [B, T, 2H]
    return output, (h_n, c_n)


# ----------------------------- pure-JAX reference ------------------------------
def _ref_forward(params, inputs, h0, c0):
    emb = jnp.take(params["embedding"], inputs, axis=0)
    emb_tm = jnp.transpose(emb, (1, 0, 2))
    H = h0.shape[-1]

    def run_dir(x_tm, w_ih, w_hh, b, h_init, c_init):
        def step(carry, x_t):
            h, c = carry
            gates = x_t @ w_ih.T + h @ w_hh.T + b
            i = jax.nn.sigmoid(gates[:, :H])
            f = jax.nn.sigmoid(gates[:, H:2 * H])
            g = jnp.tanh(gates[:, 2 * H:3 * H])
            o = jax.nn.sigmoid(gates[:, 3 * H:])
            c = f * c + i * g
            h = o * jnp.tanh(c)
            return (h, c), h
        (hT, cT), hs = lax.scan(step, (h_init, c_init), x_tm)
        return hs, hT, cT

    b = params["b_ih"] + params["b_hh"]
    hs_f, hT_f, cT_f = run_dir(emb_tm, params["w_ih"][0], params["w_hh"][0], b[0], h0[0], c0[0])
    hs_b, hT_b, cT_b = run_dir(emb_tm[::-1], params["w_ih"][1], params["w_hh"][1], b[1], h0[1], c0[1])
    out = jnp.concatenate([hs_f, hs_b[::-1]], axis=-1)
    return jnp.transpose(out, (1, 0, 2)), (jnp.stack([hT_f, hT_b]), jnp.stack([cT_f, cT_b]))


# ----------------------------- main ------------------------------
if __name__ == "__main__":
    vocab_size = 16
    latent_dim = 32     # hidden size H (4H = 128, fused 8H = 256 lanes)
    B, T = 2, 8

    key = jax.random.PRNGKey(0)
    k_par, k_tok, k_h, k_c = jax.random.split(key, 4)
    params = init_params(k_par, vocab_size, latent_dim)

    inputs = jax.random.randint(k_tok, (B, T), 0, vocab_size + 4, dtype=jnp.int32)
    h0 = jax.random.normal(k_h, (2, B, latent_dim), jnp.float32)
    c0 = jax.random.normal(k_c, (2, B, latent_dim), jnp.float32)

    output, (h_n, c_n) = jax.jit(nmt_decoder_la_forward)(params, inputs, h0, c0)
    jax.block_until_ready((output, h_n, c_n))

    assert output.shape == (B, T, 2 * latent_dim)
    assert h_n.shape == (2, B, latent_dim) and c_n.shape == (2, B, latent_dim)

    ref_out, (ref_hn, ref_cn) = _ref_forward(params, inputs, h0, c0)
    # all-f32 path -> tight tolerance (catches layout/precision regressions)
    assert jnp.allclose(output, ref_out, atol=1e-4, rtol=1e-4)
    assert jnp.allclose(h_n, ref_hn, atol=1e-4, rtol=1e-4)
    assert jnp.allclose(c_n, ref_cn, atol=1e-4, rtol=1e-4)

    print("KERNEL_OK")
</pallas_src>

<mosaic_0001>
module attributes {stable_mosaic.version = 11 : i64} {
  func.func @_bidir_lstm_kernel(%arg0: memref<16x32xf32, #tpu.memory_space<vmem>>, %arg1: memref<32x256xf32, #tpu.memory_space<vmem>>, %arg2: memref<32x256xf32, #tpu.memory_space<vmem>>, %arg3: memref<64x256xf32, #tpu.memory_space<vmem>>, %arg4: memref<1x256xf32, #tpu.memory_space<vmem>>, %arg5: memref<2x64xf32, #tpu.memory_space<vmem>>, %arg6: memref<2x64xf32, #tpu.memory_space<vmem>>, %arg7: memref<8x2x64xf32, #tpu.memory_space<vmem>>, %arg8: memref<2x2x32xf32, #tpu.memory_space<vmem>>, %arg9: memref<2x2x32xf32, #tpu.memory_space<vmem>>) attributes {dimension_semantics = [], scalar_prefetch = 0 : i64, scratch_operands = 0 : i64, tpu.core_type = #tpu.core_type<tc>} {
    %c0 = arith.constant 0 : index
    %c0_0 = arith.constant 0 : index
    %0 = vector.load %arg0[%c0, %c0_0] : memref<16x32xf32, #tpu.memory_space<vmem>>, vector<16x32xf32>
    %c0_1 = arith.constant 0 : index
    %c0_2 = arith.constant 0 : index
    %1 = vector.load %arg1[%c0_1, %c0_2] : memref<32x256xf32, #tpu.memory_space<vmem>>, vector<32x256xf32>
    %cst = arith.constant dense<0.000000e+00> : vector<16x256xf32>
    %2 = tpu.matmul %0, %1, %cst {dimension_numbers = #tpu.dot_dimension_numbers<[1], [0], [0], [1], [0, 0, 1, 1], [], []>} : vector<16x32xf32>, vector<32x256xf32>, vector<16x256xf32> -> vector<16x256xf32>
    %c0_3 = arith.constant 0 : index
    %c0_4 = arith.constant 0 : index
    %3 = vector.load %arg4[%c0_3, %c0_4] : memref<1x256xf32, #tpu.memory_space<vmem>>, vector<1x256xf32>
    %4 = vector.broadcast %3 : vector<1x256xf32> to vector<16x256xf32>
    %5 = arith.addf %2, %4 : vector<16x256xf32>
    %c0_5 = arith.constant 0 : index
    %c0_6 = arith.constant 0 : index
    %6 = vector.load %arg2[%c0_5, %c0_6] : memref<32x256xf32, #tpu.memory_space<vmem>>, vector<32x256xf32>
    %cst_7 = arith.constant dense<0.000000e+00> : vector<16x256xf32>
    %7 = tpu.matmul %0, %6, %cst_7 {dimension_numbers = #tpu.dot_dimension_numbers<[1], [0], [0], [1], [0, 0, 1, 1], [], []>} : vector<16x32xf32>, vector<32x256xf32>, vector<16x256xf32> -> vector<16x256xf32>
    %c0_8 = arith.constant 0 : index
    %c0_9 = arith.constant 0 : index
    %8 = vector.load %arg3[%c0_8, %c0_9] : memref<64x256xf32, #tpu.memory_space<vmem>>, vector<64x256xf32>
    %c0_10 = arith.constant 0 : index
    %c0_11 = arith.constant 0 : index
    %9 = vector.load %arg5[%c0_10, %c0_11] : memref<2x64xf32, #tpu.memory_space<vmem>>, vector<2x64xf32>
    %c0_12 = arith.constant 0 : index
    %c0_13 = arith.constant 0 : index
    %10 = vector.load %arg6[%c0_12, %c0_13] : memref<2x64xf32, #tpu.memory_space<vmem>>, vector<2x64xf32>
    %11 = vector.extract_strided_slice %5 {offsets = [0, 0], sizes = [2, 256], strides = [1, 1]} : vector<16x256xf32> to vector<2x256xf32>
    %12 = vector.extract_strided_slice %7 {offsets = [14, 0], sizes = [2, 256], strides = [1, 1]} : vector<16x256xf32> to vector<2x256xf32>
    %13 = arith.addf %11, %12 : vector<2x256xf32>
    %cst_14 = arith.constant dense<0.000000e+00> : vector<2x256xf32>
    %14 = tpu.matmul %9, %8, %cst_14 {dimension_numbers = #tpu.dot_dimension_numbers<[1], [0], [0], [1], [0, 0, 1, 1], [], []>} : vector<2x64xf32>, vector<64x256xf32>, vector<2x256xf32> -> vector<2x256xf32>
    %15 = arith.addf %13, %14 : vector<2x256xf32>
    %16 = vector.extract_strided_slice %15 {offsets = [0, 0], sizes = [2, 64], strides = [1, 1]} : vector<2x256xf32> to vector<2x64xf32>
    %17 = arith.negf %16 : vector<2x64xf32>
    %18 = math.exp %17 : vector<2x64xf32>
    %cst_15 = arith.constant 1.000000e+00 : f32
    %19 = vector.broadcast %cst_15 : f32 to vector<2x64xf32>
    %20 = arith.addf %19, %18 : vector<2x64xf32>
    %21 = arith.divf %19, %20 : vector<2x64xf32>
    %22 = vector.extract_strided_slice %15 {offsets = [0, 64], sizes = [2, 64], strides = [1, 1]} : vector<2x256xf32> to vector<2x64xf32>
    %23 = arith.negf %22 : vector<2x64xf32>
    %24 = math.exp %23 : vector<2x64xf32>
    %cst_16 = arith.constant 1.000000e+00 : f32
    %25 = vector.broadcast %cst_16 : f32 to vector<2x64xf32>
    %26 = arith.addf %25, %24 : vector<2x64xf32>
    %27 = arith.divf %25, %26 : vector<2x64xf32>
    %28 = vector.extract_strided_slice %15 {offsets = [0, 128], sizes = [2, 64], strides = [1, 1]} : vector<2x256xf32> to vector<2x64xf32>
    %29 = math.tanh %28 : vector<2x64xf32>
    %30 = vector.extract_strided_slice %15 {offsets = [0, 192], sizes = [2, 64], strides = [1, 1]} : vector<2x256xf32> to vector<2x64xf32>
    %31 = arith.negf %30 : vector<2x64xf32>
    %32 = math.exp %31 : vector<2x64xf32>
    %cst_17 = arith.constant 1.000000e+00 : f32
    %33 = vector.broadcast %cst_17 : f32 to vector<2x64xf32>
    %34 = arith.addf %33, %32 : vector<2x64xf32>
    %35 = arith.divf %33, %34 : vector<2x64xf32>
    %36 = arith.mulf %27, %10 : vector<2x64xf32>
    %37 = arith.mulf %21, %29 : vector<2x64xf32>
    %38 = arith.addf %36, %37 : vector<2x64xf32>
    %39 = math.tanh %38 : vector<2x64xf32>
    %40 = arith.mulf %35, %39 : vector<2x64xf32>
    %41 = vector.extract_strided_slice %40 {offsets = [0, 0], sizes = [2, 32], strides = [1, 1]} : vector<2x64xf32> to vector<2x32xf32>
    %c0_18 = arith.constant 0 : index
    %c0_19 = arith.constant 0 : index
    %c0_20 = arith.constant 0 : index
    %42 = vector.load %arg7[%c0_18, %c0_19, %c0_20] : memref<8x2x64xf32, #tpu.memory_space<vmem>>, vector<1x2x32xf32>
    %43 = vector.shape_cast %42 : vector<1x2x32xf32> to vector<2x32xf32>
    %44 = vector.shape_cast %41 : vector<2x32xf32> to vector<1x2x32xf32>
    tpu.vector_store %arg7[%c0_18, %c0_19, %c0_20], %44 {strides = array<i32>} : memref<8x2x64xf32, #tpu.memory_space<vmem>>, vector<1x2x32xf32>,
    %45 = vector.extract_strided_slice %40 {offsets = [0, 32], sizes = [2, 32], strides = [1, 1]} : vector<2x64xf32> to vector<2x32xf32>
    %c7 = arith.constant 7 : index
    %c0_21 = arith.constant 0 : index
    %c32 = arith.constant 32 : index
    %46 = vector.load %arg7[%c7, %c0_21, %c32] : memref<8x2x64xf32, #tpu.memory_space<vmem>>, vector<1x2x32xf32>
    %47 = vector.shape_cast %46 : vector<1x2x32xf32> to vector<2x32xf32>
    %48 = vector.shape_cast %45 : vector<2x32xf32> to vector<1x2x32xf32>
    tpu.vector_store %arg7[%c7, %c0_21, %c32], %48 {strides = array<i32>} : memref<8x2x64xf32, #tpu.memory_space<vmem>>, vector<1x2x32xf32>,
    %49 = vector.extract_strided_slice %5 {offsets = [2, 0], sizes = [2, 256], strides = [1, 1]} : vector<16x256xf32> to vector<2x256xf32>
    %50 = vector.extract_strided_slice %7 {offsets = [12, 0], sizes = [2, 256], strides = [1, 1]} : vector<16x256xf32> to vector<2x256xf32>
    %51 = arith.addf %49, %50 : vector<2x256xf32>
    %cst_22 = arith.constant dense<0.000000e+00> : vector<2x256xf32>
    %52 = tpu.matmul %40, %8, %cst_22 {dimension_numbers = #tpu.dot_dimension_numbers<[1], [0], [0], [1], [0, 0, 1, 1], [], []>} : vector<2x64xf32>, vector<64x256xf32>, vector<2x256xf32> -> vector<2x256xf32>
    %53 = arith.addf %51, %52 : vector<2x256xf32>
    %54 = vector.extract_strided_slice %53 {offsets = [0, 0], sizes = [2, 64], strides = [1, 1]} : vector<2x256xf32> to vector<2x64xf32>
    %55 = arith.negf %54 : vector<2x64xf32>
    %56 = math.exp %55 : vector<2x64xf32>
    %cst_23 = arith.constant 1.000000e+00 : f32
    %57 = vector.broadcast %cst_23 : f32 to vector<2x64xf32>
    %58 = arith.addf %57, %56 : vector<2x64xf32>
    %59 = arith.divf %57, %58 : vector<2x64xf32>
    %60 = vector.extract_strided_slice %53 {offsets = [0, 64], sizes = [2, 64], strides = [1, 1]} : vector<2x256xf32> to vector<2x64xf32>
    %61 = arith.negf %60 : vector<2x64xf32>
    %62 = math.exp %61 : vector<2x64xf32>
    %cst_24 = arith.constant 1.000000e+00 : f32
    %63 = vector.broadcast %cst_24 : f32 to vector<2x64xf32>
    %64 = arith.addf %63, %62 : vector<2x64xf32>
    %65 = arith.divf %63, %64 : vector<2x64xf32>
    %66 = vector.extract_strided_slice %53 {offsets = [0, 128], sizes = [2, 64], strides = [1, 1]} : vector<2x256xf32> to vector<2x64xf32>
    %67 = math.tanh %66 : vector<2x64xf32>
    %68 = vector.extract_strided_slice %53 {offsets = [0, 192], sizes = [2, 64], strides = [1, 1]} : vector<2x256xf32> to vector<2x64xf32>
    %69 = arith.negf %68 : vector<2x64xf32>
    %70 = math.exp %69 : vector<2x64xf32>
    %cst_25 = arith.constant 1.000000e+00 : f32
    %71 = vector.broadcast %cst_25 : f32 to vector<2x64xf32>
    %72 = arith.addf %71, %70 : vector<2x64xf32>
    %73 = arith.divf %71, %72 : vector<2x64xf32>
    %74 = arith.mulf %65, %38 : vector<2x64xf32>
    %75 = arith.mulf %59, %67 : vector<2x64xf32>
    %76 = arith.addf %74, %75 : vector<2x64xf32>
    %77 = math.tanh %76 : vector<2x64xf32>
    %78 = arith.mulf %73, %77 : vector<2x64xf32>
    %79 = vector.extract_strided_slice %78 {offsets = [0, 0], sizes = [2, 32], strides = [1, 1]} : vector<2x64xf32> to vector<2x32xf32>
    %c1 = arith.constant 1 : index
    %c0_26 = arith.constant 0 : index
    %c0_27 = arith.constant 0 : index
    %80 = vector.load %arg7[%c1, %c0_26, %c0_27] : memref<8x2x64xf32, #tpu.memory_space<vmem>>, vector<1x2x32xf32>
    %81 = vector.shape_cast %80 : vector<1x2x32xf32> to vector<2x32xf32>
    %82 = vector.shape_cast %79 : vector<2x32xf32> to vector<1x2x32xf32>
    tpu.vector_store %arg7[%c1, %c0_26, %c0_27], %82 {strides = array<i32>} : memref<8x2x64xf32, #tpu.memory_space<vmem>>, vector<1x2x32xf32>,
    %83 = vector.extract_strided_slice %78 {offsets = [0, 32], sizes = [2, 32], strides = [1, 1]} : vector<2x64xf32> to vector<2x32xf32>
    %c6 = arith.constant 6 : index
    %c0_28 = arith.constant 0 : index
    %c32_29 = arith.constant 32 : index
    %84 = vector.load %arg7[%c6, %c0_28, %c32_29] : memref<8x2x64xf32, #tpu.memory_space<vmem>>, vector<1x2x32xf32>
    %85 = vector.shape_cast %84 : vector<1x2x32xf32> to vector<2x32xf32>
    %86 = vector.shape_cast %83 : vector<2x32xf32> to vector<1x2x32xf32>
    tpu.vector_store %arg7[%c6, %c0_28, %c32_29], %86 {strides = array<i32>} : memref<8x2x64xf32, #tpu.memory_space<vmem>>, vector<1x2x32xf32>,
    %87 = vector.extract_strided_slice %5 {offsets = [4, 0], sizes = [2, 256], strides = [1, 1]} : vector<16x256xf32> to vector<2x256xf32>
    %88 = vector.extract_strided_slice %7 {offsets = [10, 0], sizes = [2, 256], strides = [1, 1]} : vector<16x256xf32> to vector<2x256xf32>
    %89 = arith.addf %87, %88 : vector<2x256xf32>
    %cst_30 = arith.constant dense<0.000000e+00> : vector<2x256xf32>
    %90 = tpu.matmul %78, %8, %cst_30 {dimension_numbers = #tpu.dot_dimension_numbers<[1], [0], [0], [1], [0, 0, 1, 1], [], []>} : vector<2x64xf32>, vector<64x256xf32>, vector<2x256xf32> -> vector<2x256xf32>
    %91 = arith.addf %89, %90 : vector<2x256xf32>
    %92 = vector.extract_strided_slice %91 {offsets = [0, 0], sizes = [2, 64], strides = [1, 1]} : vector<2x256xf32> to vector<2x64xf32>
    %93 = arith.negf %92 : vector<2x64xf32>
    %94 = math.exp %93 : vector<2x64xf32>
    %cst_31 = arith.constant 1.000000e+00 : f32
    %95 = vector.broadcast %cst_31 : f32 to vector<2x64xf32>
    %96 = arith.addf %95, %94 : vector<2x64xf32>
    %97 = arith.divf %95, %96 : vector<2x64xf32>
    %98 = vector.extract_strided_slice %91 {offsets = [0, 64], sizes = [2, 64], strides = [1, 1]} : vector<2x256xf32> to vector<2x64xf32>
    %99 = arith.negf %98 : vector<2x64xf32>
    %100 = math.exp %99 : vector<2x64xf32>
    %cst_32 = arith.constant 1.000000e+00 : f32
    %101 = vector.broadcast %cst_32 : f32 to vector<2x64xf32>
    %102 = arith.addf %101, %100 : vector<2x64xf32>
    %103 = arith.divf %101, %102 : vector<2x64xf32>
    %104 = vector.extract_strided_slice %91 {offsets = [0, 128], sizes = [2, 64], strides = [1, 1]} : vector<2x256xf32> to vector<2x64xf32>
    %105 = math.tanh %104 : vector<2x64xf32>
    %106 = vector.extract_strided_slice %91 {offsets = [0, 192], sizes = [2, 64], strides = [1, 1]} : vector<2x256xf32> to vector<2x64xf32>
    %107 = arith.negf %106 : vector<2x64xf32>
    %108 = math.exp %107 : vector<2x64xf32>
    %cst_33 = arith.constant 1.000000e+00 : f32
    %109 = vector.broadcast %cst_33 : f32 to vector<2x64xf32>
    %110 = arith.addf %109, %108 : vector<2x64xf32>
    %111 = arith.divf %109, %110 : vector<2x64xf32>
    %112 = arith.mulf %103, %76 : vector<2x64xf32>
    %113 = arith.mulf %97, %105 : vector<2x64xf32>
    %114 = arith.addf %112, %113 : vector<2x64xf32>
    %115 = math.tanh %114 : vector<2x64xf32>
    %116 = arith.mulf %111, %115 : vector<2x64xf32>
    %117 = vector.extract_strided_slice %116 {offsets = [0, 0], sizes = [2, 32], strides = [1, 1]} : vector<2x64xf32> to vector<2x32xf32>
    %c2 = arith.constant 2 : index
    %c0_34 = arith.constant 0 : index
    %c0_35 = arith.constant 0 : index
    %118 = vector.load %arg7[%c2, %c0_34, %c0_35] : memref<8x2x64xf32, #tpu.memory_space<vmem>>, vector<1x2x32xf32>
    %119 = vector.shape_cast %118 : vector<1x2x32xf32> to vector<2x32xf32>
    %120 = vector.shape_cast %117 : vector<2x32xf32> to vector<1x2x32xf32>
    tpu.vector_store %arg7[%c2, %c0_34, %c0_35], %120 {strides = array<i32>} : memref<8x2x64xf32, #tpu.memory_space<vmem>>, vector<1x2x32xf32>,
    %121 = vector.extract_strided_slice %116 {offsets = [0, 32], sizes = [2, 32], strides = [1, 1]} : vector<2x64xf32> to vector<2x32xf32>
    %c5 = arith.constant 5 : index
    %c0_36 = arith.constant 0 : index
    %c32_37 = arith.constant 32 : index
    %122 = vector.load %arg7[%c5, %c0_36, %c32_37] : memref<8x2x64xf32, #tpu.memory_space<vmem>>, vector<1x2x32xf32>
    %123 = vector.shape_cast %122 : vector<1x2x32xf32> to vector<2x32xf32>
    %124 = vector.shape_cast %121 : vector<2x32xf32> to vector<1x2x32xf32>
    tpu.vector_store %arg7[%c5, %c0_36, %c32_37], %124 {strides = array<i32>} : memref<8x2x64xf32, #tpu.memory_space<vmem>>, vector<1x2x32xf32>,
    %125 = vector.extract_strided_slice %5 {offsets = [6, 0], sizes = [2, 256], strides = [1, 1]} : vector<16x256xf32> to vector<2x256xf32>
    %126 = vector.extract_strided_slice %7 {offsets = [8, 0], sizes = [2, 256], strides = [1, 1]} : vector<16x256xf32> to vector<2x256xf32>
    %127 = arith.addf %125, %126 : vector<2x256xf32>
    %cst_38 = arith.constant dense<0.000000e+00> : vector<2x256xf32>
    %128 = tpu.matmul %116, %8, %cst_38 {dimension_numbers = #tpu.dot_dimension_numbers<[1], [0], [0], [1], [0, 0, 1, 1], [], []>} : vector<2x64xf32>, vector<64x256xf32>, vector<2x256xf32> -> vector<2x256xf32>
    %129 = arith.addf %127, %128 : vector<2x256xf32>
    %130 = vector.extract_strided_slice %129 {offsets = [0, 0], sizes = [2, 64], strides = [1, 1]} : vector<2x256xf32> to vector<2x64xf32>
    %131 = arith.negf %130 : vector<2x64xf32>
    %132 = math.exp %131 : vector<2x64xf32>
    %cst_39 = arith.constant 1.000000e+00 : f32
    %133 = vector.broadcast %cst_39 : f32 to vector<2x64xf32>
    %134 = arith.addf %133, %132 : vector<2x64xf32>
    %135 = arith.divf %133, %134 : vector<2x64xf32>
    %136 = vector.extract_strided_slice %129 {offsets = [0, 64], sizes = [2, 64], strides = [1, 1]} : vector<2x256xf32> to vector<2x64xf32>
    %137 = arith.negf %136 : vector<2x64xf32>
    %138 = math.exp %137 : vector<2x64xf32>
    %cst_40 = arith.constant 1.000000e+00 : f32
    %139 = vector.broadcast %cst_40 : f32 to vector<2x64xf32>
    %140 = arith.addf %139, %138 : vector<2x64xf32>
    %141 = arith.divf %139, %140 : vector<2x64xf32>
    %142 = vector.extract_strided_slice %129 {offsets = [0, 128], sizes = [2, 64], strides = [1, 1]} : vector<2x256xf32> to vector<2x64xf32>
    %143 = math.tanh %142 : vector<2x64xf32>
    %144 = vector.extract_strided_slice %129 {offsets = [0, 192], sizes = [2, 64], strides = [1, 1]} : vector<2x256xf32> to vector<2x64xf32>
    %145 = arith.negf %144 : vector<2x64xf32>
    %146 = math.exp %145 : vector<2x64xf32>
    %cst_41 = arith.constant 1.000000e+00 : f32
    %147 = vector.broadcast %cst_41 : f32 to vector<2x64xf32>
    %148 = arith.addf %147, %146 : vector<2x64xf32>
    %149 = arith.divf %147, %148 : vector<2x64xf32>
    %150 = arith.mulf %141, %114 : vector<2x64xf32>
    %151 = arith.mulf %135, %143 : vector<2x64xf32>
    %152 = arith.addf %150, %151 : vector<2x64xf32>
    %153 = math.tanh %152 : vector<2x64xf32>
    %154 = arith.mulf %149, %153 : vector<2x64xf32>
    %155 = vector.extract_strided_slice %154 {offsets = [0, 0], sizes = [2, 32], strides = [1, 1]} : vector<2x64xf32> to vector<2x32xf32>
    %c3 = arith.constant 3 : index
    %c0_42 = arith.constant 0 : index
    %c0_43 = arith.constant 0 : index
    %156 = vector.load %arg7[%c3, %c0_42, %c0_43] : memref<8x2x64xf32, #tpu.memory_space<vmem>>, vector<1x2x32xf32>
    %157 = vector.shape_cast %156 : vector<1x2x32xf32> to vector<2x32xf32>
    %158 = vector.shape_cast %155 : vector<2x32xf32> to vector<1x2x32xf32>
    tpu.vector_store %arg7[%c3, %c0_42, %c0_43], %158 {strides = array<i32>} : memref<8x2x64xf32, #tpu.memory_space<vmem>>, vector<1x2x32xf32>,
    %159 = vector.extract_strided_slice %154 {offsets = [0, 32], sizes = [2, 32], strides = [1, 1]} : vector<2x64xf32> to vector<2x32xf32>
    %c4 = arith.constant 4 : index
    %c0_44 = arith.constant 0 : index
    %c32_45 = arith.constant 32 : index
    %160 = vector.load %arg7[%c4, %c0_44, %c32_45] : memref<8x2x64xf32, #tpu.memory_space<vmem>>, vector<1x2x32xf32>
    %161 = vector.shape_cast %160 : vector<1x2x32xf32> to vector<2x32xf32>
    %162 = vector.shape_cast %159 : vector<2x32xf32> to vector<1x2x32xf32>
    tpu.vector_store %arg7[%c4, %c0_44, %c32_45], %162 {strides = array<i32>} : memref<8x2x64xf32, #tpu.memory_space<vmem>>, vector<1x2x32xf32>,
    %163 = vector.extract_strided_slice %5 {offsets = [8, 0], sizes = [2, 256], strides = [1, 1]} : vector<16x256xf32> to vector<2x256xf32>
    %164 = vector.extract_strided_slice %7 {offsets = [6, 0], sizes = [2, 256], strides = [1, 1]} : vector<16x256xf32> to vector<2x256xf32>
    %165 = arith.addf %163, %164 : vector<2x256xf32>
    %cst_46 = arith.constant dense<0.000000e+00> : vector<2x256xf32>
    %166 = tpu.matmul %154, %8, %cst_46 {dimension_numbers = #tpu.dot_dimension_numbers<[1], [0], [0], [1], [0, 0, 1, 1], [], []>} : vector<2x64xf32>, vector<64x256xf32>, vector<2x256xf32> -> vector<2x256xf32>
    %167 = arith.addf %165, %166 : vector<2x256xf32>
    %168 = vector.extract_strided_slice %167 {offsets = [0, 0], sizes = [2, 64], strides = [1, 1]} : vector<2x256xf32> to vector<2x64xf32>
    %169 = arith.negf %168 : vector<2x64xf32>
    %170 = math.exp %169 : vector<2x64xf32>
    %cst_47 = arith.constant 1.000000e+00 : f32
    %171 = vector.broadcast %cst_47 : f32 to vector<2x64xf32>
    %172 = arith.addf %171, %170 : vector<2x64xf32>
    %173 = arith.divf %171, %172 : vector<2x64xf32>
    %174 = vector.extract_strided_slice %167 {offsets = [0, 64], sizes = [2, 64], strides = [1, 1]} : vector<2x256xf32> to vector<2x64xf32>
    %175 = arith.negf %174 : vector<2x64xf32>
    %176 = math.exp %175 : vector<2x64xf32>
    %cst_48 = arith.constant 1.000000e+00 : f32
    %177 = vector.broadcast %cst_48 : f32 to vector<2x64xf32>
    %178 = arith.addf %177, %176 : vector<2x64xf32>
    %179 = arith.divf %177, %178 : vector<2x64xf32>
    %180 = vector.extract_strided_slice %167 {offsets = [0, 128], sizes = [2, 64], strides = [1, 1]} : vector<2x256xf32> to vector<2x64xf32>
    %181 = math.tanh %180 : vector<2x64xf32>
    %182 = vector.extract_strided_slice %167 {offsets = [0, 192], sizes = [2, 64], strides = [1, 1]} : vector<2x256xf32> to vector<2x64xf32>
    %183 = arith.negf %182 : vector<2x64xf32>
    %184 = math.exp %183 : vector<2x64xf32>
    %cst_49 = arith.constant 1.000000e+00 : f32
    %185 = vector.broadcast %cst_49 : f32 to vector<2x64xf32>
    %186 = arith.addf %185, %184 : vector<2x64xf32>
    %187 = arith.divf %185, %186 : vector<2x64xf32>
    %188 = arith.mulf %179, %152 : vector<2x64xf32>
    %189 = arith.mulf %173, %181 : vector<2x64xf32>
    %190 = arith.addf %188, %189 : vector<2x64xf32>
    %191 = math.tanh %190 : vector<2x64xf32>
    %192 = arith.mulf %187, %191 : vector<2x64xf32>
    %193 = vector.extract_strided_slice %192 {offsets = [0, 0], sizes = [2, 32], strides = [1, 1]} : vector<2x64xf32> to vector<2x32xf32>
    %c4_50 = arith.constant 4 : index
    %c0_51 = arith.constant 0 : index
    %c0_52 = arith.constant 0 : index
    %194 = vector.load %arg7[%c4_50, %c0_51, %c0_52] : memref<8x2x64xf32, #tpu.memory_space<vmem>>, vector<1x2x32xf32>
    %195 = vector.shape_cast %194 : vector<1x2x32xf32> to vector<2x32xf32>
    %196 = vector.shape_cast %193 : vector<2x32xf32> to vector<1x2x32xf32>
    tpu.vector_store %arg7[%c4_50, %c0_51, %c0_52], %196 {strides = array<i32>} : memref<8x2x64xf32, #tpu.memory_space<vmem>>, vector<1x2x32xf32>,
    %197 = vector.extract_strided_slice %192 {offsets = [0, 32], sizes = [2, 32], strides = [1, 1]} : vector<2x64xf32> to vector<2x32xf32>
    %c3_53 = arith.constant 3 : index
    %c0_54 = arith.constant 0 : index
    %c32_55 = arith.constant 32 : index
    %198 = vector.load %arg7[%c3_53, %c0_54, %c32_55] : memref<8x2x64xf32, #tpu.memory_space<vmem>>, vector<1x2x32xf32>
    %199 = vector.shape_cast %198 : vector<1x2x32xf32> to vector<2x32xf32>
    %200 = vector.shape_cast %197 : vector<2x32xf32> to vector<1x2x32xf32>
    tpu.vector_store %arg7[%c3_53, %c0_54, %c32_55], %200 {strides = array<i32>} : memref<8x2x64xf32, #tpu.memory_space<vmem>>, vector<1x2x32xf32>,
    %201 = vector.extract_strided_slice %5 {offsets = [10, 0], sizes = [2, 256], strides = [1, 1]} : vector<16x256xf32> to vector<2x256xf32>
    %202 = vector.extract_strided_slice %7 {offsets = [4, 0], sizes = [2, 256], strides = [1, 1]} : vector<16x256xf32> to vector<2x256xf32>
    %203 = arith.addf %201, %202 : vector<2x256xf32>
    %cst_56 = arith.constant dense<0.000000e+00> : vector<2x256xf32>
    %204 = tpu.matmul %192, %8, %cst_56 {dimension_numbers = #tpu.dot_dimension_numbers<[1], [0], [0], [1], [0, 0, 1, 1], [], []>} : vector<2x64xf32>, vector<64x256xf32>, vector<2x256xf32> -> vector<2x256xf32>
    %205 = arith.addf %203, %204 : vector<2x256xf32>
    %206 = vector.extract_strided_slice %205 {offsets = [0, 0], sizes = [2, 64], strides = [1, 1]} : vector<2x256xf32> to vector<2x64xf32>
    %207 = arith.negf %206 : vector<2x64xf32>
    %208 = math.exp %207 : vector<2x64xf32>
    %cst_57 = arith.constant 1.000000e+00 : f32
    %209 = vector.broadcast %cst_57 : f32 to vector<2x64xf32>
    %210 = arith.addf %209, %208 : vector<2x64xf32>
    %211 = arith.divf %209, %210 : vector<2x64xf32>
    %212 = vector.extract_strided_slice %205 {offsets = [0, 64], sizes = [2, 64], strides = [1, 1]} : vector<2x256xf32> to vector<2x64xf32>
    %213 = arith.negf %212 : vector<2x64xf32>
    %214 = math.exp %213 : vector<2x64xf32>
    %cst_58 = arith.constant 1.000000e+00 : f32
    %215 = vector.broadcast %cst_58 : f32 to vector<2x64xf32>
    %216 = arith.addf %215, %214 : vector<2x64xf32>
    %217 = arith.divf %215, %216 : vector<2x64xf32>
    %218 = vector.extract_strided_slice %205 {offsets = [0, 128], sizes = [2, 64], strides = [1, 1]} : vector<2x256xf32> to vector<2x64xf32>
    %219 = math.tanh %218 : vector<2x64xf32>
    %220 = vector.extract_strided_slice %205 {offsets = [0, 192], sizes = [2, 64], strides = [1, 1]} : vector<2x256xf32> to vector<2x64xf32>
    %221 = arith.negf %220 : vector<2x64xf32>
    %222 = math.exp %221 : vector<2x64xf32>
    %cst_59 = arith.constant 1.000000e+00 : f32
    %223 = vector.broadcast %cst_59 : f32 to vector<2x64xf32>
    %224 = arith.addf %223, %222 : vector<2x64xf32>
    %225 = arith.divf %223, %224 : vector<2x64xf32>
    %226 = arith.mulf %217, %190 : vector<2x64xf32>
    %227 = arith.mulf %211, %219 : vector<2x64xf32>
    %228 = arith.addf %226, %227 : vector<2x64xf32>
    %229 = math.tanh %228 : vector<2x64xf32>
    %230 = arith.mulf %225, %229 : vector<2x64xf32>
    %231 = vector.extract_strided_slice %230 {offsets = [0, 0], sizes = [2, 32], strides = [1, 1]} : vector<2x64xf32> to vector<2x32xf32>
    %c5_60 = arith.constant 5 : index
    %c0_61 = arith.constant 0 : index
    %c0_62 = arith.constant 0 : index
    %232 = vector.load %arg7[%c5_60, %c0_61, %c0_62] : memref<8x2x64xf32, #tpu.memory_space<vmem>>, vector<1x2x32xf32>
    %233 = vector.shape_cast %232 : vector<1x2x32xf32> to vector<2x32xf32>
    %234 = vector.shape_cast %231 : vector<2x32xf32> to vector<1x2x32xf32>
    tpu.vector_store %arg7[%c5_60, %c0_61, %c0_62], %234 {strides = array<i32>} : memref<8x2x64xf32, #tpu.memory_space<vmem>>, vector<1x2x32xf32>,
    %235 = vector.extract_strided_slice %230 {offsets = [0, 32], sizes = [2, 32], strides = [1, 1]} : vector<2x64xf32> to vector<2x32xf32>
    %c2_63 = arith.constant 2 : index
    %c0_64 = arith.constant 0 : index
    %c32_65 = arith.constant 32 : index
    %236 = vector.load %arg7[%c2_63, %c0_64, %c32_65] : memref<8x2x64xf32, #tpu.memory_space<vmem>>, vector<1x2x32xf32>
    %237 = vector.shape_cast %236 : vector<1x2x32xf32> to vector<2x32xf32>
    %238 = vector.shape_cast %235 : vector<2x32xf32> to vector<1x2x32xf32>
    tpu.vector_store %arg7[%c2_63, %c0_64, %c32_65], %238 {strides = array<i32>} : memref<8x2x64xf32, #tpu.memory_space<vmem>>, vector<1x2x32xf32>,
    %239 = vector.extract_strided_slice %5 {offsets = [12, 0], sizes = [2, 256], strides = [1, 1]} : vector<16x256xf32> to vector<2x256xf32>
    %240 = vector.extract_strided_slice %7 {offsets = [2, 0], sizes = [2, 256], strides = [1, 1]} : vector<16x256xf32> to vector<2x256xf32>
    %241 = arith.addf %239, %240 : vector<2x256xf32>
    %cst_66 = arith.constant dense<0.000000e+00> : vector<2x256xf32>
    %242 = tpu.matmul %230, %8, %cst_66 {dimension_numbers = #tpu.dot_dimension_numbers<[1], [0], [0], [1], [0, 0, 1, 1], [], []>} : vector<2x64xf32>, vector<64x256xf32>, vector<2x256xf32> -> vector<2x256xf32>
    %243 = arith.addf %241, %242 : vector<2x256xf32>
    %244 = vector.extract_strided_slice %243 {offsets = [0, 0], sizes = [2, 64], strides = [1, 1]} : vector<2x256xf32> to vector<2x64xf32>
    %245 = arith.negf %244 : vector<2x64xf32>
    %246 = math.exp %245 : vector<2x64xf32>
    %cst_67 = arith.constant 1.000000e+00 : f32
    %247 = vector.broadcast %cst_67 : f32 to vector<2x64xf32>
    %248 = arith.addf %247, %246 : vector<2x64xf32>
    %249 = arith.divf %247, %248 : vector<2x64xf32>
    %250 = vector.extract_strided_slice %243 {offsets = [0, 64], sizes = [2, 64], strides = [1, 1]} : vector<2x256xf32> to vector<2x64xf32>
    %251 = arith.negf %250 : vector<2x64xf32>
    %252 = math.exp %251 : vector<2x64xf32>
    %cst_68 = arith.constant 1.000000e+00 : f32
    %253 = vector.broadcast %cst_68 : f32 to vector<2x64xf32>
    %254 = arith.addf %253, %252 : vector<2x64xf32>
    %255 = arith.divf %253, %254 : vector<2x64xf32>
    %256 = vector.extract_strided_slice %243 {offsets = [0, 128], sizes = [2, 64], strides = [1, 1]} : vector<2x256xf32> to vector<2x64xf32>
    %257 = math.tanh %256 : vector<2x64xf32>
    %258 = vector.extract_strided_slice %243 {offsets = [0, 192], sizes = [2, 64], strides = [1, 1]} : vector<2x256xf32> to vector<2x64xf32>
    %259 = arith.negf %258 : vector<2x64xf32>
    %260 = math.exp %259 : vector<2x64xf32>
    %cst_69 = arith.constant 1.000000e+00 : f32
    %261 = vector.broadcast %cst_69 : f32 to vector<2x64xf32>
    %262 = arith.addf %261, %260 : vector<2x64xf32>
    %263 = arith.divf %261, %262 : vector<2x64xf32>
    %264 = arith.mulf %255, %228 : vector<2x64xf32>
    %265 = arith.mulf %249, %257 : vector<2x64xf32>
    %266 = arith.addf %264, %265 : vector<2x64xf32>
    %267 = math.tanh %266 : vector<2x64xf32>
    %268 = arith.mulf %263, %267 : vector<2x64xf32>
    %269 = vector.extract_strided_slice %268 {offsets = [0, 0], sizes = [2, 32], strides = [1, 1]} : vector<2x64xf32> to vector<2x32xf32>
    %c6_70 = arith.constant 6 : index
    %c0_71 = arith.constant 0 : index
    %c0_72 = arith.constant 0 : index
    %270 = vector.load %arg7[%c6_70, %c0_71, %c0_72] : memref<8x2x64xf32, #tpu.memory_space<vmem>>, vector<1x2x32xf32>
    %271 = vector.shape_cast %270 : vector<1x2x32xf32> to vector<2x32xf32>
    %272 = vector.shape_cast %269 : vector<2x32xf32> to vector<1x2x32xf32>
    tpu.vector_store %arg7[%c6_70, %c0_71, %c0_72], %272 {strides = array<i32>} : memref<8x2x64xf32, #tpu.memory_space<vmem>>, vector<1x2x32xf32>,
    %273 = vector.extract_strided_slice %268 {offsets = [0, 32], sizes = [2, 32], strides = [1, 1]} : vector<2x64xf32> to vector<2x32xf32>
    %c1_73 = arith.constant 1 : index
    %c0_74 = arith.constant 0 : index
    %c32_75 = arith.constant 32 : index
    %274 = vector.load %arg7[%c1_73, %c0_74, %c32_75] : memref<8x2x64xf32, #tpu.memory_space<vmem>>, vector<1x2x32xf32>
    %275 = vector.shape_cast %274 : vector<1x2x32xf32> to vector<2x32xf32>
    %276 = vector.shape_cast %273 : vector<2x32xf32> to vector<1x2x32xf32>
    tpu.vector_store %arg7[%c1_73, %c0_74, %c32_75], %276 {strides = array<i32>} : memref<8x2x64xf32, #tpu.memory_space<vmem>>, vector<1x2x32xf32>,
    %277 = vector.extract_strided_slice %5 {offsets = [14, 0], sizes = [2, 256], strides = [1, 1]} : vector<16x256xf32> to vector<2x256xf32>
    %278 = vector.extract_strided_slice %7 {offsets = [0, 0], sizes = [2, 256], strides = [1, 1]} : vector<16x256xf32> to vector<2x256xf32>
    %279 = arith.addf %277, %278 : vector<2x256xf32>
    %cst_76 = arith.constant dense<0.000000e+00> : vector<2x256xf32>
    %280 = tpu.matmul %268, %8, %cst_76 {dimension_numbers = #tpu.dot_dimension_numbers<[1], [0], [0], [1], [0, 0, 1, 1], [], []>} : vector<2x64xf32>, vector<64x256xf32>, vector<2x256xf32> -> vector<2x256xf32>
    %281 = arith.addf %279, %280 : vector<2x256xf32>
    %282 = vector.extract_strided_slice %281 {offsets = [0, 0], sizes = [2, 64], strides = [1, 1]} : vector<2x256xf32> to vector<2x64xf32>
    %283 = arith.negf %282 : vector<2x64xf32>
    %284 = math.exp %283 : vector<2x64xf32>
    %cst_77 = arith.constant 1.000000e+00 : f32
    %285 = vector.broadcast %cst_77 : f32 to vector<2x64xf32>
    %286 = arith.addf %285, %284 : vector<2x64xf32>
    %287 = arith.divf %285, %286 : vector<2x64xf32>
    %288 = vector.extract_strided_slice %281 {offsets = [0, 64], sizes = [2, 64], strides = [1, 1]} : vector<2x256xf32> to vector<2x64xf32>
    %289 = arith.negf %288 : vector<2x64xf32>
    %290 = math.exp %289 : vector<2x64xf32>
    %cst_78 = arith.constant 1.000000e+00 : f32
    %291 = vector.broadcast %cst_78 : f32 to vector<2x64xf32>
    %292 = arith.addf %291, %290 : vector<2x64xf32>
    %293 = arith.divf %291, %292 : vector<2x64xf32>
    %294 = vector.extract_strided_slice %281 {offsets = [0, 128], sizes = [2, 64], strides = [1, 1]} : vector<2x256xf32> to vector<2x64xf32>
    %295 = math.tanh %294 : vector<2x64xf32>
    %296 = vector.extract_strided_slice %281 {offsets = [0, 192], sizes = [2, 64], strides = [1, 1]} : vector<2x256xf32> to vector<2x64xf32>
    %297 = arith.negf %296 : vector<2x64xf32>
    %298 = math.exp %297 : vector<2x64xf32>
    %cst_79 = arith.constant 1.000000e+00 : f32
    %299 = vector.broadcast %cst_79 : f32 to vector<2x64xf32>
    %300 = arith.addf %299, %298 : vector<2x64xf32>
    %301 = arith.divf %299, %300 : vector<2x64xf32>
    %302 = arith.mulf %293, %266 : vector<2x64xf32>
    %303 = arith.mulf %287, %295 : vector<2x64xf32>
    %304 = arith.addf %302, %303 : vector<2x64xf32>
    %305 = math.tanh %304 : vector<2x64xf32>
    %306 = arith.mulf %301, %305 : vector<2x64xf32>
    %307 = vector.extract_strided_slice %306 {offsets = [0, 0], sizes = [2, 32], strides = [1, 1]} : vector<2x64xf32> to vector<2x32xf32>
    %c7_80 = arith.constant 7 : index
    %c0_81 = arith.constant 0 : index
    %c0_82 = arith.constant 0 : index
    %308 = vector.load %arg7[%c7_80, %c0_81, %c0_82] : memref<8x2x64xf32, #tpu.memory_space<vmem>>, vector<1x2x32xf32>
    %309 = vector.shape_cast %308 : vector<1x2x32xf32> to vector<2x32xf32>
    %310 = vector.shape_cast %307 : vector<2x32xf32> to vector<1x2x32xf32>
    tpu.vector_store %arg7[%c7_80, %c0_81, %c0_82], %310 {strides = array<i32>} : memref<8x2x64xf32, #tpu.memory_space<vmem>>, vector<1x2x32xf32>,
    %311 = vector.extract_strided_slice %306 {offsets = [0, 32], sizes = [2, 32], strides = [1, 1]} : vector<2x64xf32> to vector<2x32xf32>
    %c0_83 = arith.constant 0 : index
    %c0_84 = arith.constant 0 : index
    %c32_85 = arith.constant 32 : index
    %312 = vector.load %arg7[%c0_83, %c0_84, %c32_85] : memref<8x2x64xf32, #tpu.memory_space<vmem>>, vector<1x2x32xf32>
    %313 = vector.shape_cast %312 : vector<1x2x32xf32> to vector<2x32xf32>
    %314 = vector.shape_cast %311 : vector<2x32xf32> to vector<1x2x32xf32>
    tpu.vector_store %arg7[%c0_83, %c0_84, %c32_85], %314 {strides = array<i32>} : memref<8x2x64xf32, #tpu.memory_space<vmem>>, vector<1x2x32xf32>,
    %315 = vector.extract_strided_slice %306 {offsets = [0, 0], sizes = [2, 32], strides = [1, 1]} : vector<2x64xf32> to vector<2x32xf32>
    %c0_86 = arith.constant 0 : index
    %c0_87 = arith.constant 0 : index
    %c0_88 = arith.constant 0 : index
    %316 = vector.load %arg8[%c0_86, %c0_87, %c0_88] : memref<2x2x32xf32, #tpu.memory_space<vmem>>, vector<1x2x32xf32>
    %317 = vector.shape_cast %316 : vector<1x2x32xf32> to vector<2x32xf32>
    %318 = vector.shape_cast %315 : vector<2x32xf32> to vector<1x2x32xf32>
    tpu.vector_store %arg8[%c0_86, %c0_87, %c0_88], %318 {strides = array<i32>} : memref<2x2x32xf32, #tpu.memory_space<vmem>>, vector<1x2x32xf32>,
    %319 = vector.extract_strided_slice %306 {offsets = [0, 32], sizes = [2, 32], strides = [1, 1]} : vector<2x64xf32> to vector<2x32xf32>
    %c1_89 = arith.constant 1 : index
    %c0_90 = arith.constant 0 : index
    %c0_91 = arith.constant 0 : index
    %320 = vector.load %arg8[%c1_89, %c0_90, %c0_91] : memref<2x2x32xf32, #tpu.memory_space<vmem>>, vector<1x2x32xf32>
    %321 = vector.shape_cast %320 : vector<1x2x32xf32> to vector<2x32xf32>
    %322 = vector.shape_cast %319 : vector<2x32xf32> to vector<1x2x32xf32>
    tpu.vector_store %arg8[%c1_89, %c0_90, %c0_91], %322 {strides = array<i32>} : memref<2x2x32xf32, #tpu.memory_space<vmem>>, vector<1x2x32xf32>,
    %323 = vector.extract_strided_slice %304 {offsets = [0, 0], sizes = [2, 32], strides = [1, 1]} : vector<2x64xf32> to vector<2x32xf32>
    %c0_92 = arith.constant 0 : index
    %c0_93 = arith.constant 0 : index
    %c0_94 = arith.constant 0 : index
    %324 = vector.load %arg9[%c0_92, %c0_93, %c0_94] : memref<2x2x32xf32, #tpu.memory_space<vmem>>, vector<1x2x32xf32>
    %325 = vector.shape_cast %324 : vector<1x2x32xf32> to vector<2x32xf32>
    %326 = vector.shape_cast %323 : vector<2x32xf32> to vector<1x2x32xf32>
    tpu.vector_store %arg9[%c0_92, %c0_93, %c0_94], %326 {strides = array<i32>} : memref<2x2x32xf32, #tpu.memory_space<vmem>>, vector<1x2x32xf32>,
    %327 = vector.extract_strided_slice %304 {offsets = [0, 32], sizes = [2, 32], strides = [1, 1]} : vector<2x64xf32> to vector<2x32xf32>
    %c1_95 = arith.constant 1 : index
    %c0_96 = arith.constant 0 : index
    %c0_97 = arith.constant 0 : index
    %328 = vector.load %arg9[%c1_95, %c0_96, %c0_97] : memref<2x2x32xf32, #tpu.memory_space<vmem>>, vector<1x2x32xf32>
    %329 = vector.shape_cast %328 : vector<1x2x32xf32> to vector<2x32xf32>
    %330 = vector.shape_cast %327 : vector<2x32xf32> to vector<1x2x32xf32>
    tpu.vector_store %arg9[%c1_95, %c0_96, %c0_97], %330 {strides = array<i32>} : memref<2x2x32xf32, #tpu.memory_space<vmem>>, vector<1x2x32xf32>,
    return
  }
}

</mosaic_0001>

<llo_original>
// kernel: squeeze.14
$region0: #{squeeze.14}
  %s0 = inlined_call_operand.vmem [shape: f32[1,32,128], index: 0, kind: input, shape index: {}]
  %s1 = inlined_call_operand.vmem [shape: f32[32,4,1,32], index: 1, kind: output, shape index: {}]
  $region1: #{squeeze.14} parent=0
    #allocation0 [shape = 'u8[131072]{0}', space=vmem, size = 0x20000, scoped, tag = 'scoped mem for output reshape']
    %v2 = vld [vmem:[%s0] sm:$0xff]
    %vm3 = vcmask 261120
    %4 = vst.msk [vmem:[#allocation0] ss:$8 sm:$0xf] %vm3, %v2
    %5 = vst.msk [vmem:[#allocation0] ss:$8 sm:$0xf0] %vm3, %v2
    %s6 = scalar_lea.vmem %s0, 8
    %v7 = vld [vmem:[%s6] sm:$0xff]
    %vm8 = vcmask 261120
    %s9 = scalar_lea.vmem [#allocation0], 64
    %10 = vst.msk [vmem:[%s9] ss:$8 sm:$0xf] %vm8, %v7
    %s11 = scalar_lea.vmem [#allocation0], 64
    %12 = vst.msk [vmem:[%s11] ss:$8 sm:$0xf0] %vm8, %v7
    %s13 = scalar_lea.vmem %s0, 16
    %v14 = vld [vmem:[%s13] sm:$0xff]
    %vm15 = vcmask 261120
    %s16 = scalar_lea.vmem [#allocation0], 128
    %17 = vst.msk [vmem:[%s16] ss:$8 sm:$0xf] %vm15, %v14
    %s18 = scalar_lea.vmem [#allocation0], 128
    %19 = vst.msk [vmem:[%s18] ss:$8 sm:$0xf0] %vm15, %v14
    %s20 = scalar_lea.vmem %s0, 24
    %v21 = vld [vmem:[%s20] sm:$0xff]
    %vm22 = vcmask 261120
    %s23 = scalar_lea.vmem [#allocation0], 192
    %24 = vst.msk [vmem:[%s23] ss:$8 sm:$0xf] %vm22, %v21
    %s25 = scalar_lea.vmem [#allocation0], 192
    %26 = vst.msk [vmem:[%s25] ss:$8 sm:$0xf0] %vm22, %v21
    %v27 = vld [vmem:[%s0] sm:$0xff]
    %28 = vrot.lane.b32.xlu0 %v27, 96
    %v29 = vpop.permute.xlu0 %28
    %vm30 = vcmask 261120
    %s31 = scalar_lea.vmem [#allocation0], 1
    %32 = vst.msk [vmem:[%s31] ss:$8 sm:$0xf] %vm30, %v29
    %s33 = scalar_lea.vmem [#allocation0], 1
    %34 = vst.msk [vmem:[%s33] ss:$8 sm:$0xf0] %vm30, %v29
    %s35 = scalar_lea.vmem %s0, 8
    %v36 = vld [vmem:[%s35] sm:$0xff]
    %37 = vrot.lane.b32.xlu0 %v36, 96
    %v38 = vpop.permute.xlu0 %37
    %vm39 = vcmask 261120
    %s40 = scalar_lea.vmem [#allocation0], 65
    %41 = vst.msk [vmem:[%s40] ss:$8 sm:$0xf] %vm39, %v38
    %s42 = scalar_lea.vmem [#allocation0], 65
    %43 = vst.msk [vmem:[%s42] ss:$8 sm:$0xf0] %vm39, %v38
    %s44 = scalar_lea.vmem %s0, 16
    %v45 = vld [vmem:[%s44] sm:$0xff]
    %46 = vrot.lane.b32.xlu0 %v45, 96
    %v47 = vpop.permute.xlu0 %46
    %vm48 = vcmask 261120
    %s49 = scalar_lea.vmem [#allocation0], 129
    %50 = vst.msk [vmem:[%s49] ss:$8 sm:$0xf] %vm48, %v47
    %s51 = scalar_lea.vmem [#allocation0], 129
    %52 = vst.msk [vmem:[%s51] ss:$8 sm:$0xf0] %vm48, %v47
    %s53 = scalar_lea.vmem %s0, 24
    %v54 = vld [vmem:[%s53] sm:$0xff]
    %55 = vrot.lane.b32.xlu0 %v54, 96
    %v56 = vpop.permute.xlu0 %55
    %vm57 = vcmask 261120
    %s58 = scalar_lea.vmem [#allocation0], 193
    %59 = vst.msk [vmem:[%s58] ss:$8 sm:$0xf] %vm57, %v56
    %s60 = scalar_lea.vmem [#allocation0], 193
    %61 = vst.msk [vmem:[%s60] ss:$8 sm:$0xf0] %vm57, %v56
    %v62 = vld [vmem:[%s0] sm:$0xff]
    %63 = vrot.lane.b32.xlu0 %v62, 64
    %v64 = vpop.permute.xlu0 %63
    %vm65 = vcmask 261120
    %s66 = scalar_lea.vmem [#allocation0], 2
    %67 = vst.msk [vmem:[%s66] ss:$8 sm:$0xf] %vm65, %v64
    %s68 = scalar_lea.vmem [#allocation0], 2
    %69 = vst.msk [vmem:[%s68] ss:$8 sm:$0xf0] %vm65, %v64
    %s70 = scalar_lea.vmem %s0, 8
    %v71 = vld [vmem:[%s70] sm:$0xff]
    %72 = vrot.lane.b32.xlu0 %v71, 64
    %v73 = vpop.permute.xlu0 %72
    %vm74 = vcmask 261120
    %s75 = scalar_lea.vmem [#allocation0], 66
    %76 = vst.msk [vmem:[%s75] ss:$8 sm:$0xf] %vm74, %v73
    %s77 = scalar_lea.vmem [#allocation0], 66
    %78 = vst.msk [vmem:[%s77] ss:$8 sm:$0xf0] %vm74, %v73
    %s79 = scalar_lea.vmem %s0, 16
    %v80 = vld [vmem:[%s79] sm:$0xff]
    %81 = vrot.lane.b32.xlu0 %v80, 64
    %v82 = vpop.permute.xlu0 %81
    %vm83 = vcmask 261120
    %s84 = scalar_lea.vmem [#allocation0], 130
    %85 = vst.msk [vmem:[%s84] ss:$8 sm:$0xf] %vm83, %v82
    %s86 = scalar_lea.vmem [#allocation0], 130
    %87 = vst.msk [vmem:[%s86] ss:$8 sm:$0xf0] %vm83, %v82
    %s88 = scalar_lea.vmem %s0, 24
    %v89 = vld [vmem:[%s88] sm:$0xff]
    %90 = vrot.lane.b32.xlu0 %v89, 64
    %v91 = vpop.permute.xlu0 %90
    %vm92 = vcmask 261120
    %s93 = scalar_lea.vmem [#allocation0], 194
    %94 = vst.msk [vmem:[%s93] ss:$8 sm:$0xf] %vm92, %v91
    %s95 = scalar_lea.vmem [#allocation0], 194
    %96 = vst.msk [vmem:[%s95] ss:$8 sm:$0xf0] %vm92, %v91
    %v97 = vld [vmem:[%s0] sm:$0xff]
    %98 = vrot.lane.b32.xlu0 %v97, 32
    %v99 = vpop.permute.xlu0 %98
    %vm100 = vcmask 261120
    %s101 = scalar_lea.vmem [#allocation0], 3
    %102 = vst.msk [vmem:[%s101] ss:$8 sm:$0xf] %vm100, %v99
    %s103 = scalar_lea.vmem [#allocation0], 3
    %104 = vst.msk [vmem:[%s103] ss:$8 sm:$0xf0] %vm100, %v99
    %s105 = scalar_lea.vmem %s0, 8
    %v106 = vld [vmem:[%s105] sm:$0xff]
    %107 = vrot.lane.b32.xlu0 %v106, 32
    %v108 = vpop.permute.xlu0 %107
    %vm109 = vcmask 261120
    %s110 = scalar_lea.vmem [#allocation0], 67
    %111 = vst.msk [vmem:[%s110] ss:$8 sm:$0xf] %vm109, %v108
    %s112 = scalar_lea.vmem [#allocation0], 67
    %113 = vst.msk [vmem:[%s112] ss:$8 sm:$0xf0] %vm109, %v108
    %s114 = scalar_lea.vmem %s0, 16
    %v115 = vld [vmem:[%s114] sm:$0xff]
    %116 = vrot.lane.b32.xlu0 %v115, 32
    %v117 = vpop.permute.xlu0 %116
    %vm118 = vcmask 261120
    %s119 = scalar_lea.vmem [#allocation0], 131
    %120 = vst.msk [vmem:[%s119] ss:$8 sm:$0xf] %vm118, %v117
    %s121 = scalar_lea.vmem [#allocation0], 131
    %122 = vst.msk [vmem:[%s121] ss:$8 sm:$0xf0] %vm118, %v117
    %s123 = scalar_lea.vmem %s0, 24
    %v124 = vld [vmem:[%s123] sm:$0xff]
    %125 = vrot.lane.b32.xlu0 %v124, 32
    %v126 = vpop.permute.xlu0 %125
    %vm127 = vcmask 261120
    %s128 = scalar_lea.vmem [#allocation0], 195
    %129 = vst.msk [vmem:[%s128] ss:$8 sm:$0xf] %vm127, %v126
    %s130 = scalar_lea.vmem [#allocation0], 195
    %131 = vst.msk [vmem:[%s130] ss:$8 sm:$0xf0] %vm127, %v126
    %s133 = sshll.u32 1, 4
    %s134 = ssub.s32 %s133, 1
    %v136 = vld [vmem:[#allocation0] sm:%s134]
    %s137 = sshll.u32 1, 4
    %s138 = ssub.s32 %s137, 1
    %139 = vst [vmem:[%s1] sm:%s138] %v136
    %s140 = scalar_lea.vmem [#allocation0], 8
    %v141 = vld [vmem:[%s140] sm:%s134]
    %s142 = sshll.u32 1, 4
    %s143 = ssub.s32 %s142, 1
    %s144 = scalar_lea.vmem %s1, 4
    %145 = vst [vmem:[%s144] sm:%s143] %v141
    %s146 = scalar_lea.vmem [#allocation0], 16
    %v147 = vld [vmem:[%s146] sm:%s134]
    %s148 = sshll.u32 1, 4
    %s149 = ssub.s32 %s148, 1
    %s150 = smul.addr 4, 2
    %s151 = scalar_lea.vmem %s1, %s150
    %152 = vst [vmem:[%s151] sm:%s149] %v147
    %s153 = scalar_lea.vmem [#allocation0], 24
    %v154 = vld [vmem:[%s153] sm:%s134]
    %s155 = sshll.u32 1, 4
    %s156 = ssub.s32 %s155, 1
    %s157 = smul.addr 4, 3
    %s158 = scalar_lea.vmem %s1, %s157
    %159 = vst [vmem:[%s158] sm:%s156] %v154
    %s160 = scalar_lea.vmem [#allocation0], 32
    %v161 = vld [vmem:[%s160] sm:%s134]
    %s162 = sshll.u32 1, 4
    %s163 = ssub.s32 %s162, 1
    %s164 = smul.addr 4, 4
    %s165 = scalar_lea.vmem %s1, %s164
    %166 = vst [vmem:[%s165] sm:%s163] %v161
    %s167 = scalar_lea.vmem [#allocation0], 40
    %v168 = vld [vmem:[%s167] sm:%s134]
    %s169 = sshll.u32 1, 4
    %s170 = ssub.s32 %s169, 1
    %s171 = smul.addr 4, 5
    %s172 = scalar_lea.vmem %s1, %s171
    %173 = vst [vmem:[%s172] sm:%s170] %v168
    %s174 = scalar_lea.vmem [#allocation0], 48
    %v175 = vld [vmem:[%s174] sm:%s134]
    %s176 = sshll.u32 1, 4
    %s177 = ssub.s32 %s176, 1
    %s178 = smul.addr 4, 6
    %s179 = scalar_lea.vmem %s1, %s178
    %180 = vst [vmem:[%s179] sm:%s177] %v175
    %s181 = scalar_lea.vmem [#allocation0], 56
    %v182 = vld [vmem:[%s181] sm:%s134]
    %s183 = sshll.u32 1, 4
    %s184 = ssub.s32 %s183, 1
    %s185 = smul.addr 4, 7
    %s186 = scalar_lea.vmem %s1, %s185
    %187 = vst [vmem:[%s186] sm:%s184] %v182
    %s188 = scalar_lea.vmem [#allocation0], 64
    %v189 = vld [vmem:[%s188] sm:%s134]
    %s190 = sshll.u32 1, 4
    %s191 = ssub.s32 %s190, 1
    %s192 = smul.addr 4, 8
    %s193 = scalar_lea.vmem %s1, %s192
    %194 = vst [vmem:[%s193] sm:%s191] %v189
    %s195 = scalar_lea.vmem [#allocation0], 72
    %v196 = vld [vmem:[%s195] sm:%s134]
    %s197 = sshll.u32 1, 4
    %s198 = ssub.s32 %s197, 1
    %s199 = smul.addr 4, 9
    %s200 = scalar_lea.vmem %s1, %s199
    %201 = vst [vmem:[%s200] sm:%s198] %v196
    %s202 = scalar_lea.vmem [#allocation0], 80
    %v203 = vld [vmem:[%s202] sm:%s134]
    %s204 = sshll.u32 1, 4
    %s205 = ssub.s32 %s204, 1
    %s206 = smul.addr 4, 10
    %s207 = scalar_lea.vmem %s1, %s206
    %208 = vst [vmem:[%s207] sm:%s205] %v203
    %s209 = scalar_lea.vmem [#allocation0], 88
    %v210 = vld [vmem:[%s209] sm:%s134]
    %s211 = sshll.u32 1, 4
    %s212 = ssub.s32 %s211, 1
    %s213 = smul.addr 4, 11
    %s214 = scalar_lea.vmem %s1, %s213
    %215 = vst [vmem:[%s214] sm:%s212] %v210
    %s216 = scalar_lea.vmem [#allocation0], 96
    %v217 = vld [vmem:[%s216] sm:%s134]
    %s218 = sshll.u32 1, 4
    %s219 = ssub.s32 %s218, 1
    %s220 = smul.addr 4, 12
    %s221 = scalar_lea.vmem %s1, %s220
    %222 = vst [vmem:[%s221] sm:%s219] %v217
    %s223 = scalar_lea.vmem [#allocation0], 104
    %v224 = vld [vmem:[%s223] sm:%s134]
    %s225 = sshll.u32 1, 4
    %s226 = ssub.s32 %s225, 1
    %s227 = smul.addr 4, 13
    %s228 = scalar_lea.vmem %s1, %s227
    %229 = vst [vmem:[%s228] sm:%s226] %v224
    %s230 = scalar_lea.vmem [#allocation0], 112
    %v231 = vld [vmem:[%s230] sm:%s134]
    %s232 = sshll.u32 1, 4
    %s233 = ssub.s32 %s232, 1
    %s234 = smul.addr 4, 14
    %s235 = scalar_lea.vmem %s1, %s234
    %236 = vst [vmem:[%s235] sm:%s233] %v231
    %s237 = scalar_lea.vmem [#allocation0], 120
    %v238 = vld [vmem:[%s237] sm:%s134]
    %s239 = sshll.u32 1, 4
    %s240 = ssub.s32 %s239, 1
    %s241 = smul.addr 4, 15
    %s242 = scalar_lea.vmem %s1, %s241
    %243 = vst [vmem:[%s242] sm:%s240] %v238
    %s244 = scalar_lea.vmem [#allocation0], 128
    %v245 = vld [vmem:[%s244] sm:%s134]
    %s246 = sshll.u32 1, 4
    %s247 = ssub.s32 %s246, 1
    %s248 = smul.addr 4, 16
    %s249 = scalar_lea.vmem %s1, %s248
    %250 = vst [vmem:[%s249] sm:%s247] %v245
    %s251 = scalar_lea.vmem [#allocation0], 136
    %v252 = vld [vmem:[%s251] sm:%s134]
    %s253 = sshll.u32 1, 4
    %s254 = ssub.s32 %s253, 1
    %s255 = smul.addr 4, 17
    %s256 = scalar_lea.vmem %s1, %s255
    %257 = vst [vmem:[%s256] sm:%s254] %v252
    %s258 = scalar_lea.vmem [#allocation0], 144
    %v259 = vld [vmem:[%s258] sm:%s134]
    %s260 = sshll.u32 1, 4
    %s261 = ssub.s32 %s260, 1
    %s262 = smul.addr 4, 18
    %s263 = scalar_lea.vmem %s1, %s262
    %264 = vst [vmem:[%s263] sm:%s261] %v259
    %s265 = scalar_lea.vmem [#allocation0], 152
    %v266 = vld [vmem:[%s265] sm:%s134]
    %s267 = sshll.u32 1, 4
    %s268 = ssub.s32 %s267, 1
    %s269 = smul.addr 4, 19
    %s270 = scalar_lea.vmem %s1, %s269
    %271 = vst [vmem:[%s270] sm:%s268] %v266
    %s272 = scalar_lea.vmem [#allocation0], 160
    %v273 = vld [vmem:[%s272] sm:%s134]
    %s274 = sshll.u32 1, 4
    %s275 = ssub.s32 %s274, 1
    %s276 = smul.addr 4, 20
    %s277 = scalar_lea.vmem %s1, %s276
    %278 = vst [vmem:[%s277] sm:%s275] %v273
    %s279 = scalar_lea.vmem [#allocation0], 168
    %v280 = vld [vmem:[%s279] sm:%s134]
    %s281 = sshll.u32 1, 4
    %s282 = ssub.s32 %s281, 1
    %s283 = smul.addr 4, 21
    %s284 = scalar_lea.vmem %s1, %s283
    %285 = vst [vmem:[%s284] sm:%s282] %v280
    %s286 = scalar_lea.vmem [#allocation0], 176
    %v287 = vld [vmem:[%s286] sm:%s134]
    %s288 = sshll.u32 1, 4
    %s289 = ssub.s32 %s288, 1
    %s290 = smul.addr 4, 22
    %s291 = scalar_lea.vmem %s1, %s290
    %292 = vst [vmem:[%s291] sm:%s289] %v287
    %s293 = scalar_lea.vmem [#allocation0], 184
    %v294 = vld [vmem:[%s293] sm:%s134]
    %s295 = sshll.u32 1, 4
    %s296 = ssub.s32 %s295, 1
    %s297 = smul.addr 4, 23
    %s298 = scalar_lea.vmem %s1, %s297
    %299 = vst [vmem:[%s298] sm:%s296] %v294
    %s300 = scalar_lea.vmem [#allocation0], 192
    %v301 = vld [vmem:[%s300] sm:%s134]
    %s302 = sshll.u32 1, 4
    %s303 = ssub.s32 %s302, 1
    %s304 = smul.addr 4, 24
    %s305 = scalar_lea.vmem %s1, %s304
    %306 = vst [vmem:[%s305] sm:%s303] %v301
    %s307 = scalar_lea.vmem [#allocation0], 200
    %v308 = vld [vmem:[%s307] sm:%s134]
    %s309 = sshll.u32 1, 4
    %s310 = ssub.s32 %s309, 1
    %s311 = smul.addr 4, 25
    %s312 = scalar_lea.vmem %s1, %s311
    %313 = vst [vmem:[%s312] sm:%s310] %v308
    %s314 = scalar_lea.vmem [#allocation0], 208
    %v315 = vld [vmem:[%s314] sm:%s134]
    %s316 = sshll.u32 1, 4
    %s317 = ssub.s32 %s316, 1
    %s318 = smul.addr 4, 26
    %s319 = scalar_lea.vmem %s1, %s318
    %320 = vst [vmem:[%s319] sm:%s317] %v315
    %s321 = scalar_lea.vmem [#allocation0], 216
    %v322 = vld [vmem:[%s321] sm:%s134]
    %s323 = sshll.u32 1, 4
    %s324 = ssub.s32 %s323, 1
    %s325 = smul.addr 4, 27
    %s326 = scalar_lea.vmem %s1, %s325
    %327 = vst [vmem:[%s326] sm:%s324] %v322
    %s328 = scalar_lea.vmem [#allocation0], 224
    %v329 = vld [vmem:[%s328] sm:%s134]
    %s330 = sshll.u32 1, 4
    %s331 = ssub.s32 %s330, 1
    %s332 = smul.addr 4, 28
    %s333 = scalar_lea.vmem %s1, %s332
    %334 = vst [vmem:[%s333] sm:%s331] %v329
    %s335 = scalar_lea.vmem [#allocation0], 232
    %v336 = vld [vmem:[%s335] sm:%s134]
    %s337 = sshll.u32 1, 4
    %s338 = ssub.s32 %s337, 1
    %s339 = smul.addr 4, 29
    %s340 = scalar_lea.vmem %s1, %s339
    %341 = vst [vmem:[%s340] sm:%s338] %v336
    %s342 = scalar_lea.vmem [#allocation0], 240
    %v343 = vld [vmem:[%s342] sm:%s134]
    %s344 = sshll.u32 1, 4
    %s345 = ssub.s32 %s344, 1
    %s346 = smul.addr 4, 30
    %s347 = scalar_lea.vmem %s1, %s346
    %348 = vst [vmem:[%s347] sm:%s345] %v343
    %s349 = scalar_lea.vmem [#allocation0], 248
    %v350 = vld [vmem:[%s349] sm:%s134]
    %s351 = sshll.u32 1, 4
    %s352 = ssub.s32 %s351, 1
    %s353 = smul.addr 4, 31
    %s354 = scalar_lea.vmem %s1, %s353
    %355 = vst [vmem:[%s354] sm:%s352] %v350

// kernel: squeeze.12
$region0: #{squeeze.12}
  %s0 = inlined_call_operand.vmem [shape: f32[128], index: 0, kind: input, shape index: {}]
  %s1 = inlined_call_operand.vmem [shape: f32[1,4,1,32], index: 1, kind: output, shape index: {}]
  $region1: #{squeeze.12} parent=0
    #allocation0 [shape = 'u8[4096]{0}', space=vmem, size = 0x1000, scoped, tag = 'scoped mem for output reshape']
    #allocation1 [shape = 'u8[4096]{0}', space=vmem, size = 0x1000, scoped, tag = 'scoped mem for input reshape']
    %s3 = sshll.u32 1, 1
    %s4 = ssub.s32 %s3, 1
    %v5 = vld [vmem:[%s0] sm:%s4]
    %6 = vst [vmem:[#allocation1] sm:%s4] %v5
    %v7 = vld [vmem:[#allocation1] sm:$0x1]
    %vm8 = vcmask 261120
    %9 = vst.msk [vmem:[#allocation0] sm:$0x1] %vm8, %v7
    %v10 = vld [vmem:[#allocation1] sm:$0x1]
    %11 = vrot.lane.b32.xlu0 %v10, 96
    %v12 = vpop.permute.xlu0 %11
    %vm13 = vcmask 261120
    %s14 = scalar_lea.vmem [#allocation0], 1
    %15 = vst.msk [vmem:[%s14] sm:$0x1] %vm13, %v12
    %v16 = vld [vmem:[#allocation1] sm:$0x1]
    %17 = vrot.lane.b32.xlu0 %v16, 64
    %v18 = vpop.permute.xlu0 %17
    %vm19 = vcmask 261120
    %s20 = scalar_lea.vmem [#allocation0], 2
    %21 = vst.msk [vmem:[%s20] sm:$0x1] %vm19, %v18
    %v22 = vld [vmem:[#allocation1] sm:$0x1]
    %23 = vrot.lane.b32.xlu0 %v22, 32
    %v24 = vpop.permute.xlu0 %23
    %vm25 = vcmask 261120
    %s26 = scalar_lea.vmem [#allocation0], 3
    %27 = vst.msk [vmem:[%s26] sm:$0x1] %vm25, %v24
    %s29 = sshll.u32 1, 4
    %s30 = ssub.s32 %s29, 1
    %v32 = vld [vmem:[#allocation0] sm:%s30]
    %s33 = sshll.u32 1, 4
    %s34 = ssub.s32 %s33, 1
    %35 = vst [vmem:[%s1] sm:%s34] %v32

// kernel: nmt_decoder_la_forward.1
$region0: #{nmt_decoder_la_forward.1}
  #allocation0 [shape = 'u32[]', space=smem, size = 0x4, offset = 0x4, fixed_abs, tag = 'smem constant byte address 0x4 - core index']
  #allocation1 [shape = 'u32[144,128]{1,0:T(1,128)}', space=vmem, size = 0x12000, scoped, tag = 'internal scratch']
  %s0 = inlined_call_operand.vmem [shape: f32[16,32], index: 0, kind: input, shape index: {}]
  %s1 = inlined_call_operand.vmem [shape: f32[32,256], index: 1, kind: input, shape index: {}]
  %s2 = inlined_call_operand.vmem [shape: f32[32,256], index: 2, kind: input, shape index: {}]
  %s3 = inlined_call_operand.vmem [shape: f32[64,256], index: 3, kind: input, shape index: {}]
  %s4 = inlined_call_operand.vmem [shape: f32[1,256], index: 4, kind: input, shape index: {}]
  %s5 = inlined_call_operand.vmem [shape: f32[2,64], index: 5, kind: input, shape index: {}]
  %s6 = inlined_call_operand.vmem [shape: f32[2,64], index: 6, kind: input, shape index: {}]
  %s7 = inlined_call_operand.vmem [shape: f32[8,2,64], index: 7, kind: output, shape index: {0}]
  %s8 = inlined_call_operand.hbm [shape: f32[2,2,32], index: 8, kind: output, shape index: {1}]
  %s9 = inlined_call_operand.hbm [shape: f32[2,2,32], index: 9, kind: output, shape index: {2}]
  %10 = xla_tuple %s7, %s8, %s9
  %s11 = sld [smem:[#allocation0]]
  $region54: #{nmt_decoder_la_forward.1} parent=0
    _
  %s13 = ssub.s32 1, %s11
  %s14 = scalar_select 0, %s13, %s11
  $region1: #{nmt_decoder_la_forward.1} parent=0
    #allocation2 [shape = 'u8[2048]{0}', space=vmem, size = 0x800, scoped, tag = 'output window, operand 1, single buffered']
    #allocation3 [shape = 's32[1]{0}', space=sflag, size = 0x4, scoped, tag = 'scoped memory for nmt_decoder_la_forward.1']
    #allocation4 [shape = 'u8[2048]{0}', space=vmem, size = 0x800, scoped, tag = 'output window, operand 2, single buffered']
    #allocation5 [shape = 's32[1]{0}', space=sflag, size = 0x4, scoped, tag = 'scoped memory for nmt_decoder_la_forward.1']
    %15 = vsyncpa [#allocation3], 0
    %16 = vsyncpa [#allocation5], 0
    // Predicated region
    $region2: #{nmt_decoder_la_forward.1} parent=1 // pred_check
      _
    $region3: #{nmt_decoder_la_forward.1} parent=1 // pred_check_branch
      %18 = sbr.rel (0) target = $region5
    $region4: #{nmt_decoder_la_forward.1} parent=1 // pred_region
      _
    $region5: #{nmt_decoder_la_forward.1} parent=1 // pred_fallthru
      _
    // Predicated region
    $region6: #{nmt_decoder_la_forward.1} parent=1 // pred_check
      _
    $region7: #{nmt_decoder_la_forward.1} parent=1 // pred_check_branch
      %20 = sbr.rel (0) target = $region9
    $region8: #{nmt_decoder_la_forward.1} parent=1 // pred_region
      _
    $region9: #{nmt_decoder_la_forward.1} parent=1 // pred_fallthru
      _
    // Predicated region
    $region10: #{nmt_decoder_la_forward.1} parent=1 // pred_check
      _
    $region11: #{nmt_decoder_la_forward.1} parent=1 // pred_check_branch
      %22 = sbr.rel (0) target = $region13
    $region12: #{nmt_decoder_la_forward.1} parent=1 // pred_region
      _
    $region13: #{nmt_decoder_la_forward.1} parent=1 // pred_fallthru
      _
    // Predicated region
    $region14: #{nmt_decoder_la_forward.1} parent=1 // pred_check
      _
    $region15: #{nmt_decoder_la_forward.1} parent=1 // pred_check_branch
      %24 = sbr.rel (0) target = $region17
    $region16: #{nmt_decoder_la_forward.1} parent=1 // pred_region
      _
    $region17: #{nmt_decoder_la_forward.1} parent=1 // pred_fallthru
      _
    // Predicated region
    $region18: #{nmt_decoder_la_forward.1} parent=1 // pred_check
      _
    $region19: #{nmt_decoder_la_forward.1} parent=1 // pred_check_branch
      %26 = sbr.rel (0) target = $region21
    $region20: #{nmt_decoder_la_forward.1} parent=1 // pred_region
      _
    $region21: #{nmt_decoder_la_forward.1} parent=1 // pred_fallthru
      _
    // Predicated region
    $region22: #{nmt_decoder_la_forward.1} parent=1 // pred_check
      _
    $region23: #{nmt_decoder_la_forward.1} parent=1 // pred_check_branch
      %28 = sbr.rel (0) target = $region25
    $region24: #{nmt_decoder_la_forward.1} parent=1 // pred_region
      _
    $region25: #{nmt_decoder_la_forward.1} parent=1 // pred_fallthru
      _
    // Predicated region
    $region26: #{nmt_decoder_la_forward.1} parent=1 // pred_check
      _
    $region27: #{nmt_decoder_la_forward.1} parent=1 // pred_check_branch
      %30 = sbr.rel (0) target = $region29
    $region28: #{nmt_decoder_la_forward.1} parent=1 // pred_region
      _
    $region29: #{nmt_decoder_la_forward.1} parent=1 // pred_fallthru
      _
    %v31 = vld [vmem:[%s0] sm:$0xff]
    %v32 = vld [vmem:[%s0 + $0x8] sm:$0xff]
    %v33 = vld [vmem:[%s1] sm:$0xff]
    %v34 = vld [vmem:[%s1 + $0x8] sm:$0xff]
    %v35 = vld [vmem:[%s1 + $0x10] sm:$0xff]
    %v36 = vld [vmem:[%s1 + $0x18] sm:$0xff]
    %v37 = vld [vmem:[%s1 + $0x20] sm:$0xff]
    %v38 = vld [vmem:[%s1 + $0x28] sm:$0xff]
    %v39 = vld [vmem:[%s1 + $0x30] sm:$0xff]
    %v40 = vld [vmem:[%s1 + $0x38] sm:$0xff]
    %v41 = vld [vmem:[%s4] sm:$0x3]
    %v43 = vlaneseq
    %v44 = vshrl.u32 %v43, 7
    %v45 = vsub.s32 0, %v44
    %v46 = vrot.slane %v41, %v45
    %v47 = vlaneseq
    %v48 = vshrl.u32 %v47, 7
    %v49 = vsub.s32 1, %v48
    %v50 = vrot.slane %v41, %v49
    %vm53 = vcmask 261120
    %v55 = vsel %vm53, %v31, 0
    %v58 = vsel %vm53, %v32, 0
    %60 = vmatprep.subr.mxu0 0.0
    %61 = vmatpush1.msra.mxu0 0.0
    %62 = vmatprep.subr.mxu0 0.0
    %63 = vmatpush1.msra.mxu0 0.0
    %64 = vmatprep.subr.mxu0 0.0
    %65 = vmatpush1.msra.mxu0 0.0
    %66 = vmatprep.subr.mxu0 0.0
    %67 = vmatpush1.msra.mxu0 0.0
    %68 = vmatprep.subr.mxu0 0.0
    %69 = vmatpush1.msra.mxu0 0.0
    %70 = vmatprep.subr.mxu0 0.0
    %71 = vmatpush1.msra.mxu0 0.0
    %72 = vmatprep.subr.mxu0 0.0
    %73 = vmatpush1.msra.mxu0 0.0
    %74 = vmatprep.subr.mxu0 0.0
    %75 = vmatpush1.msra.mxu0 0.0
    %76 = vmatprep.subr.mxu0 0.0
    %77 = vmatpush1.msra.mxu0 0.0
    %78 = vmatprep.subr.mxu0 0.0
    %79 = vmatpush1.msra.mxu0 0.0
    %80 = vmatprep.subr.mxu0 0.0
    %81 = vmatpush1.msra.mxu0 0.0
    %82 = vmatprep.subr.mxu0 0.0
    %83 = vmatpush1.msra.mxu0 0.0
    %84 = vmatprep.subr.mxu0 %v40
    %85 = vmatpush1.msra.mxu0 %v39
    %86 = vmatprep.subr.mxu0 %v38
    %87 = vmatpush1.msra.mxu0 %v37
    %88 = vmatprep.subr.mxu0 %v36
    %89 = vmatpush1.msra.mxu0 %v35
    %90 = vmatprep.subr.mxu0 %v34
    %91 = vmatpush1.msra.mxu0 %v33
    %92 = vmatprep.subr.mxu0 0.0
    %93 = vmatpush2.msra.mxu0 0.0
    %94 = vmatprep.subr.mxu0 0.0
    %95 = vmatpush2.msra.mxu0 0.0
    %96 = vmatprep.subr.mxu0 0.0
    %97 = vmatpush2.msra.mxu0 0.0
    %98 = vmatprep.subr.mxu0 0.0
    %99 = vmatpush2.msra.mxu0 0.0
    %100 = vmatprep.subr.mxu0 0.0
    %101 = vmatpush2.msra.mxu0 0.0
    %102 = vmatprep.subr.mxu0 0.0
    %103 = vmatpush2.msra.mxu0 0.0
    %104 = vmatprep.subr.mxu0 0.0
    %105 = vmatpush2.msra.mxu0 0.0
    %106 = vmatprep.subr.mxu0 0.0
    %107 = vmatpush2.msra.mxu0 0.0
    %108 = vmatprep.subr.mxu0 0.0
    %109 = vmatpush2.msra.mxu0 0.0
    %110 = vmatprep.subr.mxu0 0.0
    %111 = vmatpush2.msra.mxu0 0.0
    %112 = vmatprep.subr.mxu0 0.0
    %113 = vmatpush2.msra.mxu0 0.0
    %114 = vmatprep.subr.mxu0 0.0
    %115 = vmatpush2.msra.mxu0 0.0
    %116 = vmatprep.subr.mxu0 0.0
    %117 = vmatpush2.msra.mxu0 0.0
    %118 = vmatprep.subr.mxu0 0.0
    %119 = vmatpush2.msra.mxu0 0.0
    %120 = vmatprep.subr.mxu0 0.0
    %121 = vmatpush2.msra.mxu0 0.0
    %122 = vmatprep.subr.mxu0 0.0
    %123 = vmatpush2.msra.mxu0 0.0
    %124 = vmatprep.mubr.f32.mxu0 0.0
    %125 = vmatmul.mubr.f32.gmra.mxu0 %v55
    %v126 = vpop.f32.mrf.mxu0
    %v127 = vadd.f32 %v46, %v126
    %v128 = vpop.f32.mrf.mxu0
    %v129 = vadd.f32 %v50, %v128
    %130 = vmatprep.mubr.f32.mxu0 0.0
    %131 = vmatmul.mubr.f32.gmra.mxu0 %v58
    %v132 = vpop.f32.mrf.mxu0
    %v133 = vadd.f32 %v46, %v132
    %v134 = vpop.f32.mrf.mxu0
    %v135 = vadd.f32 %v50, %v134
    %136 = vdwg.mxu0
    %v137 = vld [vmem:[%s2] sm:$0xff]
    %v138 = vld [vmem:[%s2 + $0x8] sm:$0xff]
    %v139 = vld [vmem:[%s2 + $0x10] sm:$0xff]
    %v140 = vld [vmem:[%s2 + $0x18] sm:$0xff]
    %v141 = vld [vmem:[%s2 + $0x20] sm:$0xff]
    %v142 = vld [vmem:[%s2 + $0x28] sm:$0xff]
    %v143 = vld [vmem:[%s2 + $0x30] sm:$0xff]
    %v144 = vld [vmem:[%s2 + $0x38] sm:$0xff]
    %145 = vmatprep.subr.mxu0 0.0
    %146 = vmatpush1.msra.mxu0 0.0
    %147 = vmatprep.subr.mxu0 0.0
    %148 = vmatpush1.msra.mxu0 0.0
    %149 = vmatprep.subr.mxu0 0.0
    %150 = vmatpush1.msra.mxu0 0.0
    %151 = vmatprep.subr.mxu0 0.0
    %152 = vmatpush1.msra.mxu0 0.0
    %153 = vmatprep.subr.mxu0 0.0
    %154 = vmatpush1.msra.mxu0 0.0
    %155 = vmatprep.subr.mxu0 0.0
    %156 = vmatpush1.msra.mxu0 0.0
    %157 = vmatprep.subr.mxu0 0.0
    %158 = vmatpush1.msra.mxu0 0.0
    %159 = vmatprep.subr.mxu0 0.0
    %160 = vmatpush1.msra.mxu0 0.0
    %161 = vmatprep.subr.mxu0 0.0
    %162 = vmatpush1.msra.mxu0 0.0
    %163 = vmatprep.subr.mxu0 0.0
    %164 = vmatpush1.msra.mxu0 0.0
    %165 = vmatprep.subr.mxu0 0.0
    %166 = vmatpush1.msra.mxu0 0.0
    %167 = vmatprep.subr.mxu0 0.0
    %168 = vmatpush1.msra.mxu0 0.0
    %169 = vmatprep.subr.mxu0 %v144
    %170 = vmatpush1.msra.mxu0 %v143
    %171 = vmatprep.subr.mxu0 %v142
    %172 = vmatpush1.msra.mxu0 %v141
    %173 = vmatprep.subr.mxu0 %v140
    %174 = vmatpush1.msra.mxu0 %v139
    %175 = vmatprep.subr.mxu0 %v138
    %176 = vmatpush1.msra.mxu0 %v137
    %177 = vmatprep.subr.mxu0 0.0
    %178 = vmatpush2.msra.mxu0 0.0
    %179 = vmatprep.subr.mxu0 0.0
    %180 = vmatpush2.msra.mxu0 0.0
    %181 = vmatprep.subr.mxu0 0.0
    %182 = vmatpush2.msra.mxu0 0.0
    %183 = vmatprep.subr.mxu0 0.0
    %184 = vmatpush2.msra.mxu0 0.0
    %185 = vmatprep.subr.mxu0 0.0
    %186 = vmatpush2.msra.mxu0 0.0
    %187 = vmatprep.subr.mxu0 0.0
    %188 = vmatpush2.msra.mxu0 0.0
    %189 = vmatprep.subr.mxu0 0.0
    %190 = vmatpush2.msra.mxu0 0.0
    %191 = vmatprep.subr.mxu0 0.0
    %192 = vmatpush2.msra.mxu0 0.0
    %193 = vmatprep.subr.mxu0 0.0
    %194 = vmatpush2.msra.mxu0 0.0
    %195 = vmatprep.subr.mxu0 0.0
    %196 = vmatpush2.msra.mxu0 0.0
    %197 = vmatprep.subr.mxu0 0.0
    %198 = vmatpush2.msra.mxu0 0.0
    %199 = vmatprep.subr.mxu0 0.0
    %200 = vmatpush2.msra.mxu0 0.0
    %201 = vmatprep.subr.mxu0 0.0
    %202 = vmatpush2.msra.mxu0 0.0
    %203 = vmatprep.subr.mxu0 0.0
    %204 = vmatpush2.msra.mxu0 0.0
    %205 = vmatprep.subr.mxu0 0.0
    %206 = vmatpush2.msra.mxu0 0.0
    %207 = vmatprep.subr.mxu0 0.0
    %208 = vmatpush2.msra.mxu0 0.0
    %209 = vmatprep.mubr.f32.mxu0 0.0
    %210 = vmatmul.mubr.f32.gmra.mxu0 %v55
    %v211 = vpop.f32.mrf.mxu0
    %v212 = vadd.f32 0.0, %v211
    %v213 = vpop.f32.mrf.mxu0
    %v214 = vadd.f32 0.0, %v213
    %215 = vmatprep.mubr.f32.mxu0 0.0
    %216 = vmatmul.mubr.f32.gmra.mxu0 %v58
    %v217 = vpop.f32.mrf.mxu0
    %v218 = vadd.f32 0.0, %v217
    %v219 = vpop.f32.mrf.mxu0
    %v220 = vadd.f32 0.0, %v219
    %221 = vdwg.mxu0
    %v222 = vld [vmem:[%s3] sm:$0xff]
    %v223 = vld [vmem:[%s3 + $0x8] sm:$0xff]
    %v224 = vld [vmem:[%s3 + $0x10] sm:$0xff]
    %v225 = vld [vmem:[%s3 + $0x18] sm:$0xff]
    %v226 = vld [vmem:[%s3 + $0x20] sm:$0xff]
    %v227 = vld [vmem:[%s3 + $0x28] sm:$0xff]
    %v228 = vld [vmem:[%s3 + $0x30] sm:$0xff]
    %v229 = vld [vmem:[%s3 + $0x38] sm:$0xff]
    %v230 = vld [vmem:[%s3 + $0x40] sm:$0xff]
    %v231 = vld [vmem:[%s3 + $0x48] sm:$0xff]
    %v232 = vld [vmem:[%s3 + $0x50] sm:$0xff]
    %v233 = vld [vmem:[%s3 + $0x58] sm:$0xff]
    %v234 = vld [vmem:[%s3 + $0x60] sm:$0xff]
    %v235 = vld [vmem:[%s3 + $0x68] sm:$0xff]
    %v236 = vld [vmem:[%s3 + $0x70] sm:$0xff]
    %v237 = vld [vmem:[%s3 + $0x78] sm:$0xff]
    %v238 = vld [vmem:[%s5] sm:$0x3]
    %v239 = vld [vmem:[%s6] sm:$0x3]
    %v242 = vrot.slane %v218, 6
    %v243 = vrot.slane %v220, 6
    %v246 = vadd.f32 %v127, %v242
    %v247 = vadd.f32 %v129, %v243
    %vm248 = vcmask 523264
    %v250 = vsel %vm248, %v238, 0
    %252 = vmatprep.subr.mxu0 0.0
    %253 = vmatpush1.msra.mxu0 0.0
    %254 = vmatprep.subr.mxu0 0.0
    %255 = vmatpush1.msra.mxu0 0.0
    %256 = vmatprep.subr.mxu0 0.0
    %257 = vmatpush1.msra.mxu0 0.0
    %258 = vmatprep.subr.mxu0 0.0
    %259 = vmatpush1.msra.mxu0 0.0
    %260 = vmatprep.subr.mxu0 0.0
    %261 = vmatpush1.msra.mxu0 0.0
    %262 = vmatprep.subr.mxu0 0.0
    %263 = vmatpush1.msra.mxu0 0.0
    %264 = vmatprep.subr.mxu0 0.0
    %265 = vmatpush1.msra.mxu0 0.0
    %266 = vmatprep.subr.mxu0 0.0
    %267 = vmatpush1.msra.mxu0 0.0
    %268 = vmatprep.subr.mxu0 %v237
    %269 = vmatpush1.msra.mxu0 %v236
    %270 = vmatprep.subr.mxu0 %v235
    %271 = vmatpush1.msra.mxu0 %v234
    %272 = vmatprep.subr.mxu0 %v233
    %273 = vmatpush1.msra.mxu0 %v232
    %274 = vmatprep.subr.mxu0 %v231
    %275 = vmatpush1.msra.mxu0 %v230
    %276 = vmatprep.subr.mxu0 %v229
    %277 = vmatpush1.msra.mxu0 %v228
    %278 = vmatprep.subr.mxu0 %v227
    %279 = vmatpush1.msra.mxu0 %v226
    %280 = vmatprep.subr.mxu0 %v225
    %281 = vmatpush1.msra.mxu0 %v224
    %282 = vmatprep.subr.mxu0 %v223
    %283 = vmatpush1.msra.mxu0 %v222
    %284 = vmatprep.subr.mxu0 0.0
    %285 = vmatpush2.msra.mxu0 0.0
    %286 = vmatprep.subr.mxu0 0.0
    %287 = vmatpush2.msra.mxu0 0.0
    %288 = vmatprep.subr.mxu0 0.0
    %289 = vmatpush2.msra.mxu0 0.0
    %290 = vmatprep.subr.mxu0 0.0
    %291 = vmatpush2.msra.mxu0 0.0
    %292 = vmatprep.subr.mxu0 0.0
    %293 = vmatpush2.msra.mxu0 0.0
    %294 = vmatprep.subr.mxu0 0.0
    %295 = vmatpush2.msra.mxu0 0.0
    %296 = vmatprep.subr.mxu0 0.0
    %297 = vmatpush2.msra.mxu0 0.0
    %298 = vmatprep.subr.mxu0 0.0
    %299 = vmatpush2.msra.mxu0 0.0
    %300 = vmatprep.subr.mxu0 0.0
    %301 = vmatpush2.msra.mxu0 0.0
    %302 = vmatprep.subr.mxu0 0.0
    %303 = vmatpush2.msra.mxu0 0.0
    %304 = vmatprep.subr.mxu0 0.0
    %305 = vmatpush2.msra.mxu0 0.0
    %306 = vmatprep.subr.mxu0 0.0
    %307 = vmatpush2.msra.mxu0 0.0
    %308 = vmatprep.subr.mxu0 0.0
    %309 = vmatpush2.msra.mxu0 0.0
    %310 = vmatprep.subr.mxu0 0.0
    %311 = vmatpush2.msra.mxu0 0.0
    %312 = vmatprep.subr.mxu0 0.0
    %313 = vmatpush2.msra.mxu0 0.0
    %314 = vmatprep.subr.mxu0 0.0
    %315 = vmatpush2.msra.mxu0 0.0
    %316 = vmatprep.mubr.f32.mxu0 0.0
    %317 = vmatmul.mubr.f32.gmra.mxu0 %v250
    %v318 = vpop.f32.mrf.mxu0
    %v319 = vadd.f32 0.0, %v318
    %v320 = vpop.f32.mrf.mxu0
    %v321 = vadd.f32 0.0, %v320
    %322 = vdwg.mxu0
    %v323 = vadd.f32 %v246, %v319
    %v324 = vadd.f32 %v247, %v321
    %v325 = vxor.u32 %v323, 2147483648
    %v326 = vmul.f32 %v325, 1.442695
    %v327 = vpow.pop %v326
    %v328 = vadd.f32 %v327, 1.0
    %v329 = vrcp.pop %v328
    %v330 = vmul.f32 1.0, %v329
    %v331 = vtanh.pop %v324
    %v332 = vxor.u32 %v324, 2147483648
    %v333 = vmul.f32 %v332, 1.442695
    %v334 = vpow.pop %v333
    %v335 = vadd.f32 %v334, 1.0
    %v336 = vrcp.pop %v335
    %v337 = vmul.f32 1.0, %v336
    %339 = vrot.lane.b32.xlu0 %v239, 64
    %v340 = vpop.permute.xlu0 %339
    %v342 = vmul.f32 %v330, %v340
    %v343 = vmul.f32 %v330, %v331
    %345 = vrot.lane.b32.xlu0 %v343, 64
    %v346 = vpop.permute.xlu0 %345
    %v348 = vadd.f32 %v342, %v346
    %v349 = vtanh.pop %v348
    %v350 = vmul.f32 %v337, %v349
    %352 = vrot.lane.b32.xlu0 %v350, 64
    %v353 = vpop.permute.xlu0 %352
    %vm355 = vcmask 254976
    %356 = vst.msk [vmem:[%s7] sm:$0x3] %vm355, %v353
    %s357 = scalar_lea.vmem %s7, 14
    %vm358 = vcmask 517376
    %359 = vst.msk [vmem:[%s357] sm:$0x3] %vm358, %v353
    %v360 = vrot.slane %v218, 2
    %v361 = vrot.slane %v220, 2
    %v364 = vadd.f32 %v127, %v360
    %v365 = vadd.f32 %v129, %v361
    %v366 = vsel %vm248, %v353, 0
    %368 = vmatprep.subr.mxu0 0.0
    %369 = vmatpush1.msra.mxu0 0.0
    %370 = vmatprep.subr.mxu0 0.0
    %371 = vmatpush1.msra.mxu0 0.0
    %372 = vmatprep.subr.mxu0 0.0
    %373 = vmatpush1.msra.mxu0 0.0
    %374 = vmatprep.subr.mxu0 0.0
    %375 = vmatpush1.msra.mxu0 0.0
    %376 = vmatprep.subr.mxu0 0.0
    %377 = vmatpush1.msra.mxu0 0.0
    %378 = vmatprep.subr.mxu0 0.0
    %379 = vmatpush1.msra.mxu0 0.0
    %380 = vmatprep.subr.mxu0 0.0
    %381 = vmatpush1.msra.mxu0 0.0
    %382 = vmatprep.subr.mxu0 0.0
    %383 = vmatpush1.msra.mxu0 0.0
    %384 = vmatprep.subr.mxu0 %v237
    %385 = vmatpush1.msra.mxu0 %v236
    %386 = vmatprep.subr.mxu0 %v235
    %387 = vmatpush1.msra.mxu0 %v234
    %388 = vmatprep.subr.mxu0 %v233
    %389 = vmatpush1.msra.mxu0 %v232
    %390 = vmatprep.subr.mxu0 %v231
    %391 = vmatpush1.msra.mxu0 %v230
    %392 = vmatprep.subr.mxu0 %v229
    %393 = vmatpush1.msra.mxu0 %v228
    %394 = vmatprep.subr.mxu0 %v227
    %395 = vmatpush1.msra.mxu0 %v226
    %396 = vmatprep.subr.mxu0 %v225
    %397 = vmatpush1.msra.mxu0 %v224
    %398 = vmatprep.subr.mxu0 %v223
    %399 = vmatpush1.msra.mxu0 %v222
    %400 = vmatprep.subr.mxu0 0.0
    %401 = vmatpush2.msra.mxu0 0.0
    %402 = vmatprep.subr.mxu0 0.0
    %403 = vmatpush2.msra.mxu0 0.0
    %404 = vmatprep.subr.mxu0 0.0
    %405 = vmatpush2.msra.mxu0 0.0
    %406 = vmatprep.subr.mxu0 0.0
    %407 = vmatpush2.msra.mxu0 0.0
    %408 = vmatprep.subr.mxu0 0.0
    %409 = vmatpush2.msra.mxu0 0.0
    %410 = vmatprep.subr.mxu0 0.0
    %411 = vmatpush2.msra.mxu0 0.0
    %412 = vmatprep.subr.mxu0 0.0
    %413 = vmatpush2.msra.mxu0 0.0
    %414 = vmatprep.subr.mxu0 0.0
    %415 = vmatpush2.msra.mxu0 0.0
    %416 = vmatprep.subr.mxu0 0.0
    %417 = vmatpush2.msra.mxu0 0.0
    %418 = vmatprep.subr.mxu0 0.0
    %419 = vmatpush2.msra.mxu0 0.0
    %420 = vmatprep.subr.mxu0 0.0
    %421 = vmatpush2.msra.mxu0 0.0
    %422 = vmatprep.subr.mxu0 0.0
    %423 = vmatpush2.msra.mxu0 0.0
    %424 = vmatprep.subr.mxu0 0.0
    %425 = vmatpush2.msra.mxu0 0.0
    %426 = vmatprep.subr.mxu0 0.0
    %427 = vmatpush2.msra.mxu0 0.0
    %428 = vmatprep.subr.mxu0 0.0
    %429 = vmatpush2.msra.mxu0 0.0
    %430 = vmatprep.subr.mxu0 0.0
    %431 = vmatpush2.msra.mxu0 0.0
    %432 = vmatprep.mubr.f32.mxu0 0.0
    %433 = vmatmul.mubr.f32.gmra.mxu0 %v366
    %v434 = vpop.f32.mrf.mxu0
    %v435 = vadd.f32 0.0, %v434
    %v436 = vpop.f32.mrf.mxu0
    %v437 = vadd.f32 0.0, %v436
    %438 = vdwg.mxu0
    %v441 = vrot.slane %v435, 6
    %v442 = vrot.slane %v437, 6
    %v445 = vadd.f32 %v364, %v441
    %v446 = vadd.f32 %v365, %v442
    %v447 = vxor.u32 %v445, 2147483648
    %v448 = vmul.f32 %v447, 1.442695
    %v449 = vpow.pop %v448
    %v450 = vadd.f32 %v449, 1.0
    %v451 = vrcp.pop %v450
    %v452 = vmul.f32 1.0, %v451
    %v453 = vtanh.pop %v446
    %v454 = vxor.u32 %v446, 2147483648
    %v455 = vmul.f32 %v454, 1.442695
    %v456 = vpow.pop %v455
    %v457 = vadd.f32 %v456, 1.0
    %v458 = vrcp.pop %v457
    %v459 = vmul.f32 1.0, %v458
    %v461 = vrot.slane %v348, 6
    %v463 = vmul.f32 %v452, %v461
    %v464 = vmul.f32 %v452, %v453
    %466 = vrot.lane.b32.xlu0 %v464, 64
    %v467 = vpop.permute.xlu0 %466
    %v469 = vadd.f32 %v463, %v467
    %v470 = vtanh.pop %v469
    %v471 = vmul.f32 %v459, %v470
    %473 = vrot.lane.b32.xlu0 %v471, 64
    %v474 = vpop.permute.xlu0 %473
    %s476 = scalar_lea.vmem %s7, 2
    %vm477 = vcmask 257026
    %478 = vst.msk [vmem:[%s476 - $0x2] sm:$0xc] %vm477, %v474
    %s479 = scalar_lea.vmem %s7, 12
    %vm480 = vcmask 519426
    %481 = vst.msk [vmem:[%s479 - $0x2] sm:$0xc] %vm480, %v474
    %v482 = vrot.slane %v471, 2
    %483 = vrot.lane.b32.xlu0 %v482, 64
    %v484 = vpop.permute.xlu0 %483
    %v485 = vsel %vm248, %v484, 0
    %487 = vmatprep.subr.mxu0 0.0
    %488 = vmatpush1.msra.mxu0 0.0
    %489 = vmatprep.subr.mxu0 0.0
    %490 = vmatpush1.msra.mxu0 0.0
    %491 = vmatprep.subr.mxu0 0.0
    %492 = vmatpush1.msra.mxu0 0.0
    %493 = vmatprep.subr.mxu0 0.0
    %494 = vmatpush1.msra.mxu0 0.0
    %495 = vmatprep.subr.mxu0 0.0
    %496 = vmatpush1.msra.mxu0 0.0
    %497 = vmatprep.subr.mxu0 0.0
    %498 = vmatpush1.msra.mxu0 0.0
    %499 = vmatprep.subr.mxu0 0.0
    %500 = vmatpush1.msra.mxu0 0.0
    %501 = vmatprep.subr.mxu0 0.0
    %502 = vmatpush1.msra.mxu0 0.0
    %503 = vmatprep.subr.mxu0 %v237
    %504 = vmatpush1.msra.mxu0 %v236
    %505 = vmatprep.subr.mxu0 %v235
    %506 = vmatpush1.msra.mxu0 %v234
    %507 = vmatprep.subr.mxu0 %v233
    %508 = vmatpush1.msra.mxu0 %v232
    %509 = vmatprep.subr.mxu0 %v231
    %510 = vmatpush1.msra.mxu0 %v230
    %511 = vmatprep.subr.mxu0 %v229
    %512 = vmatpush1.msra.mxu0 %v228
    %513 = vmatprep.subr.mxu0 %v227
    %514 = vmatpush1.msra.mxu0 %v226
    %515 = vmatprep.subr.mxu0 %v225
    %516 = vmatpush1.msra.mxu0 %v224
    %517 = vmatprep.subr.mxu0 %v223
    %518 = vmatpush1.msra.mxu0 %v222
    %519 = vmatprep.subr.mxu0 0.0
    %520 = vmatpush2.msra.mxu0 0.0
    %521 = vmatprep.subr.mxu0 0.0
    %522 = vmatpush2.msra.mxu0 0.0
    %523 = vmatprep.subr.mxu0 0.0
    %524 = vmatpush2.msra.mxu0 0.0
    %525 = vmatprep.subr.mxu0 0.0
    %526 = vmatpush2.msra.mxu0 0.0
    %527 = vmatprep.subr.mxu0 0.0
    %528 = vmatpush2.msra.mxu0 0.0
    %529 = vmatprep.subr.mxu0 0.0
    %530 = vmatpush2.msra.mxu0 0.0
    %531 = vmatprep.subr.mxu0 0.0
    %532 = vmatpush2.msra.mxu0 0.0
    %533 = vmatprep.subr.mxu0 0.0
    %534 = vmatpush2.msra.mxu0 0.0
    %535 = vmatprep.subr.mxu0 0.0
    %536 = vmatpush2.msra.mxu0 0.0
    %537 = vmatprep.subr.mxu0 0.0
    %538 = vmatpush2.msra.mxu0 0.0
    %539 = vmatprep.subr.mxu0 0.0
    %540 = vmatpush2.msra.mxu0 0.0
    %541 = vmatprep.subr.mxu0 0.0
    %542 = vmatpush2.msra.mxu0 0.0
    %543 = vmatprep.subr.mxu0 0.0
    %544 = vmatpush2.msra.mxu0 0.0
    %545 = vmatprep.subr.mxu0 0.0
    %546 = vmatpush2.msra.mxu0 0.0
    %547 = vmatprep.subr.mxu0 0.0
    %548 = vmatpush2.msra.mxu0 0.0
    %549 = vmatprep.subr.mxu0 0.0
    %550 = vmatpush2.msra.mxu0 0.0
    %551 = vmatprep.mubr.f32.mxu0 0.0
    %552 = vmatmul.mubr.f32.gmra.mxu0 %v485
    %v553 = vpop.f32.mrf.mxu0
    %v554 = vadd.f32 0.0, %v553
    %v555 = vpop.f32.mrf.mxu0
    %v556 = vadd.f32 0.0, %v555
    %557 = vdwg.mxu0
    %v560 = vrot.slane %v554, 4
    %v561 = vrot.slane %v556, 4
    %v564 = vadd.f32 %v246, %v560
    %v565 = vadd.f32 %v247, %v561
    %v566 = vxor.u32 %v564, 2147483648
    %v567 = vmul.f32 %v566, 1.442695
    %v568 = vpow.pop %v567
    %v569 = vadd.f32 %v568, 1.0
    %v570 = vrcp.pop %v569
    %v571 = vmul.f32 1.0, %v570
    %v572 = vtanh.pop %v565
    %v573 = vxor.u32 %v565, 2147483648
    %v574 = vmul.f32 %v573, 1.442695
    %v575 = vpow.pop %v574
    %v576 = vadd.f32 %v575, 1.0
    %v577 = vrcp.pop %v576
    %v578 = vmul.f32 1.0, %v577
    %v580 = vrot.slane %v469, 6
    %v582 = vmul.f32 %v571, %v580
    %v583 = vmul.f32 %v571, %v572
    %585 = vrot.lane.b32.xlu0 %v583, 64
    %v586 = vpop.permute.xlu0 %585
    %v588 = vadd.f32 %v582, %v586
    %v589 = vtanh.pop %v588
    %v590 = vmul.f32 %v578, %v589
    %592 = vrot.lane.b32.xlu0 %v590, 64
    %v593 = vpop.permute.xlu0 %592
    %s595 = scalar_lea.vmem %s7, 4
    %vm596 = vcmask 259076
    %597 = vst.msk [vmem:[%s595 - $0x4] sm:$0x30] %vm596, %v593
    %s598 = scalar_lea.vmem %s7, 10
    %vm599 = vcmask 521476
    %600 = vst.msk [vmem:[%s598 - $0x4] sm:$0x30] %vm599, %v593
    %v601 = vrot.slane %v590, 4
    %602 = vrot.lane.b32.xlu0 %v601, 64
    %v603 = vpop.permute.xlu0 %602
    %v604 = vsel %vm248, %v603, 0
    %606 = vmatprep.subr.mxu0 0.0
    %607 = vmatpush1.msra.mxu0 0.0
    %608 = vmatprep.subr.mxu0 0.0
    %609 = vmatpush1.msra.mxu0 0.0
    %610 = vmatprep.subr.mxu0 0.0
    %611 = vmatpush1.msra.mxu0 0.0
    %612 = vmatprep.subr.mxu0 0.0
    %613 = vmatpush1.msra.mxu0 0.0
    %614 = vmatprep.subr.mxu0 0.0
    %615 = vmatpush1.msra.mxu0 0.0
    %616 = vmatprep.subr.mxu0 0.0
    %617 = vmatpush1.msra.mxu0 0.0
    %618 = vmatprep.subr.mxu0 0.0
    %619 = vmatpush1.msra.mxu0 0.0
    %620 = vmatprep.subr.mxu0 0.0
    %621 = vmatpush1.msra.mxu0 0.0
    %622 = vmatprep.subr.mxu0 %v237
    %623 = vmatpush1.msra.mxu0 %v236
    %624 = vmatprep.subr.mxu0 %v235
    %625 = vmatpush1.msra.mxu0 %v234
    %626 = vmatprep.subr.mxu0 %v233
    %627 = vmatpush1.msra.mxu0 %v232
    %628 = vmatprep.subr.mxu0 %v231
    %629 = vmatpush1.msra.mxu0 %v230
    %630 = vmatprep.subr.mxu0 %v229
    %631 = vmatpush1.msra.mxu0 %v228
    %632 = vmatprep.subr.mxu0 %v227
    %633 = vmatpush1.msra.mxu0 %v226
    %634 = vmatprep.subr.mxu0 %v225
    %635 = vmatpush1.msra.mxu0 %v224
    %636 = vmatprep.subr.mxu0 %v223
    %637 = vmatpush1.msra.mxu0 %v222
    %638 = vmatprep.subr.mxu0 0.0
    %639 = vmatpush2.msra.mxu0 0.0
    %640 = vmatprep.subr.mxu0 0.0
    %641 = vmatpush2.msra.mxu0 0.0
    %642 = vmatprep.subr.mxu0 0.0
    %643 = vmatpush2.msra.mxu0 0.0
    %644 = vmatprep.subr.mxu0 0.0
    %645 = vmatpush2.msra.mxu0 0.0
    %646 = vmatprep.subr.mxu0 0.0
    %647 = vmatpush2.msra.mxu0 0.0
    %648 = vmatprep.subr.mxu0 0.0
    %649 = vmatpush2.msra.mxu0 0.0
    %650 = vmatprep.subr.mxu0 0.0
    %651 = vmatpush2.msra.mxu0 0.0
    %652 = vmatprep.subr.mxu0 0.0
    %653 = vmatpush2.msra.mxu0 0.0
    %654 = vmatprep.subr.mxu0 0.0
    %655 = vmatpush2.msra.mxu0 0.0
    %656 = vmatprep.subr.mxu0 0.0
    %657 = vmatpush2.msra.mxu0 0.0
    %658 = vmatprep.subr.mxu0 0.0
    %659 = vmatpush2.msra.mxu0 0.0
    %660 = vmatprep.subr.mxu0 0.0
    %661 = vmatpush2.msra.mxu0 0.0
    %662 = vmatprep.subr.mxu0 0.0
    %663 = vmatpush2.msra.mxu0 0.0
    %664 = vmatprep.subr.mxu0 0.0
    %665 = vmatpush2.msra.mxu0 0.0
    %666 = vmatprep.subr.mxu0 0.0
    %667 = vmatpush2.msra.mxu0 0.0
    %668 = vmatprep.subr.mxu0 0.0
    %669 = vmatpush2.msra.mxu0 0.0
    %670 = vmatprep.mubr.f32.mxu0 0.0
    %671 = vmatmul.mubr.f32.gmra.mxu0 %v604
    %v672 = vpop.f32.mrf.mxu0
    %v673 = vadd.f32 0.0, %v672
    %v674 = vpop.f32.mrf.mxu0
    %v675 = vadd.f32 0.0, %v674
    %676 = vdwg.mxu0
    %v679 = vrot.slane %v673, 2
    %v680 = vrot.slane %v675, 2
    %v683 = vadd.f32 %v364, %v679
    %v684 = vadd.f32 %v365, %v680
    %v685 = vxor.u32 %v683, 2147483648
    %v686 = vmul.f32 %v685, 1.442695
    %v687 = vpow.pop %v686
    %v688 = vadd.f32 %v687, 1.0
    %v689 = vrcp.pop %v688
    %v690 = vmul.f32 1.0, %v689
    %v691 = vtanh.pop %v684
    %v692 = vxor.u32 %v684, 2147483648
    %v693 = vmul.f32 %v692, 1.442695
    %v694 = vpow.pop %v693
    %v695 = vadd.f32 %v694, 1.0
    %v696 = vrcp.pop %v695
    %v697 = vmul.f32 1.0, %v696
    %v699 = vrot.slane %v588, 6
    %v701 = vmul.f32 %v690, %v699
    %v702 = vmul.f32 %v690, %v691
    %704 = vrot.lane.b32.xlu0 %v702, 64
    %v705 = vpop.permute.xlu0 %704
    %v707 = vadd.f32 %v701, %v705
    %v708 = vtanh.pop %v707
    %v709 = vmul.f32 %v697, %v708
    %711 = vrot.lane.b32.xlu0 %v709, 64
    %v712 = vpop.permute.xlu0 %711
    %s714 = scalar_lea.vmem %s7, 6
    %vm715 = vcmask 261126
    %716 = vst.msk [vmem:[%s714 - $0x6] sm:$0xc0] %vm715, %v712
    %s717 = scalar_lea.vmem %s7, 8
    %vm718 = vcmask 523526
    %719 = vst.msk [vmem:[%s717 - $0x6] sm:$0xc0] %vm718, %v712
    %v722 = vrot.slane %v212, 6
    %v723 = vrot.slane %v214, 6
    %v726 = vadd.f32 %v133, %v722
    %v727 = vadd.f32 %v135, %v723
    %v728 = vrot.slane %v709, 6
    %729 = vrot.lane.b32.xlu0 %v728, 64
    %v730 = vpop.permute.xlu0 %729
    %v731 = vsel %vm248, %v730, 0
    %733 = vmatprep.subr.mxu0 0.0
    %734 = vmatpush1.msra.mxu0 0.0
    %735 = vmatprep.subr.mxu0 0.0
    %736 = vmatpush1.msra.mxu0 0.0
    %737 = vmatprep.subr.mxu0 0.0
    %738 = vmatpush1.msra.mxu0 0.0
    %739 = vmatprep.subr.mxu0 0.0
    %740 = vmatpush1.msra.mxu0 0.0
    %741 = vmatprep.subr.mxu0 0.0
    %742 = vmatpush1.msra.mxu0 0.0
    %743 = vmatprep.subr.mxu0 0.0
    %744 = vmatpush1.msra.mxu0 0.0
    %745 = vmatprep.subr.mxu0 0.0
    %746 = vmatpush1.msra.mxu0 0.0
    %747 = vmatprep.subr.mxu0 0.0
    %748 = vmatpush1.msra.mxu0 0.0
    %749 = vmatprep.subr.mxu0 %v237
    %750 = vmatpush1.msra.mxu0 %v236
    %751 = vmatprep.subr.mxu0 %v235
    %752 = vmatpush1.msra.mxu0 %v234
    %753 = vmatprep.subr.mxu0 %v233
    %754 = vmatpush1.msra.mxu0 %v232
    %755 = vmatprep.subr.mxu0 %v231
    %756 = vmatpush1.msra.mxu0 %v230
    %757 = vmatprep.subr.mxu0 %v229
    %758 = vmatpush1.msra.mxu0 %v228
    %759 = vmatprep.subr.mxu0 %v227
    %760 = vmatpush1.msra.mxu0 %v226
    %761 = vmatprep.subr.mxu0 %v225
    %762 = vmatpush1.msra.mxu0 %v224
    %763 = vmatprep.subr.mxu0 %v223
    %764 = vmatpush1.msra.mxu0 %v222
    %765 = vmatprep.subr.mxu0 0.0
    %766 = vmatpush2.msra.mxu0 0.0
    %767 = vmatprep.subr.mxu0 0.0
    %768 = vmatpush2.msra.mxu0 0.0
    %769 = vmatprep.subr.mxu0 0.0
    %770 = vmatpush2.msra.mxu0 0.0
    %771 = vmatprep.subr.mxu0 0.0
    %772 = vmatpush2.msra.mxu0 0.0
    %773 = vmatprep.subr.mxu0 0.0
    %774 = vmatpush2.msra.mxu0 0.0
    %775 = vmatprep.subr.mxu0 0.0
    %776 = vmatpush2.msra.mxu0 0.0
    %777 = vmatprep.subr.mxu0 0.0
    %778 = vmatpush2.msra.mxu0 0.0
    %779 = vmatprep.subr.mxu0 0.0
    %780 = vmatpush2.msra.mxu0 0.0
    %781 = vmatprep.subr.mxu0 0.0
    %782 = vmatpush2.msra.mxu0 0.0
    %783 = vmatprep.subr.mxu0 0.0
    %784 = vmatpush2.msra.mxu0 0.0
    %785 = vmatprep.subr.mxu0 0.0
    %786 = vmatpush2.msra.mxu0 0.0
    %787 = vmatprep.subr.mxu0 0.0
    %788 = vmatpush2.msra.mxu0 0.0
    %789 = vmatprep.subr.mxu0 0.0
    %790 = vmatpush2.msra.mxu0 0.0
    %791 = vmatprep.subr.mxu0 0.0
    %792 = vmatpush2.msra.mxu0 0.0
    %793 = vmatprep.subr.mxu0 0.0
    %794 = vmatpush2.msra.mxu0 0.0
    %795 = vmatprep.subr.mxu0 0.0
    %796 = vmatpush2.msra.mxu0 0.0
    %797 = vmatprep.mubr.f32.mxu0 0.0
    %798 = vmatmul.mubr.f32.gmra.mxu0 %v731
    %v799 = vpop.f32.mrf.mxu0
    %v800 = vadd.f32 0.0, %v799
    %v801 = vpop.f32.mrf.mxu0
    %v802 = vadd.f32 0.0, %v801
    %803 = vdwg.mxu0
    %v804 = vadd.f32 %v726, %v800
    %v805 = vadd.f32 %v727, %v802
    %v806 = vxor.u32 %v804, 2147483648
    %v807 = vmul.f32 %v806, 1.442695
    %v808 = vpow.pop %v807
    %v809 = vadd.f32 %v808, 1.0
    %v810 = vrcp.pop %v809
    %v811 = vmul.f32 1.0, %v810
    %v812 = vtanh.pop %v805
    %v813 = vxor.u32 %v805, 2147483648
    %v814 = vmul.f32 %v813, 1.442695
    %v815 = vpow.pop %v814
    %v816 = vadd.f32 %v815, 1.0
    %v817 = vrcp.pop %v816
    %v818 = vmul.f32 1.0, %v817
    %v820 = vrot.slane %v707, 6
    %v822 = vmul.f32 %v811, %v820
    %v823 = vmul.f32 %v811, %v812
    %825 = vrot.lane.b32.xlu0 %v823, 64
    %v826 = vpop.permute.xlu0 %825
    %v828 = vadd.f32 %v822, %v826
    %v829 = vtanh.pop %v828
    %v830 = vmul.f32 %v818, %v829
    %832 = vrot.lane.b32.xlu0 %v830, 64
    %v833 = vpop.permute.xlu0 %832
    %835 = vst.msk [vmem:[%s717] sm:$0x3] %vm355, %v833
    %836 = vst.msk [vmem:[%s714] sm:$0x3] %vm358, %v833
    %v837 = vrot.slane %v212, 2
    %v838 = vrot.slane %v214, 2
    %v841 = vadd.f32 %v133, %v837
    %v842 = vadd.f32 %v135, %v838
    %v843 = vsel %vm248, %v833, 0
    %845 = vmatprep.subr.mxu0 0.0
    %846 = vmatpush1.msra.mxu0 0.0
    %847 = vmatprep.subr.mxu0 0.0
    %848 = vmatpush1.msra.mxu0 0.0
    %849 = vmatprep.subr.mxu0 0.0
    %850 = vmatpush1.msra.mxu0 0.0
    %851 = vmatprep.subr.mxu0 0.0
    %852 = vmatpush1.msra.mxu0 0.0
    %853 = vmatprep.subr.mxu0 0.0
    %854 = vmatpush1.msra.mxu0 0.0
    %855 = vmatprep.subr.mxu0 0.0
    %856 = vmatpush1.msra.mxu0 0.0
    %857 = vmatprep.subr.mxu0 0.0
    %858 = vmatpush1.msra.mxu0 0.0
    %859 = vmatprep.subr.mxu0 0.0
    %860 = vmatpush1.msra.mxu0 0.0
    %861 = vmatprep.subr.mxu0 %v237
    %862 = vmatpush1.msra.mxu0 %v236
    %863 = vmatprep.subr.mxu0 %v235
    %864 = vmatpush1.msra.mxu0 %v234
    %865 = vmatprep.subr.mxu0 %v233
    %866 = vmatpush1.msra.mxu0 %v232
    %867 = vmatprep.subr.mxu0 %v231
    %868 = vmatpush1.msra.mxu0 %v230
    %869 = vmatprep.subr.mxu0 %v229
    %870 = vmatpush1.msra.mxu0 %v228
    %871 = vmatprep.subr.mxu0 %v227
    %872 = vmatpush1.msra.mxu0 %v226
    %873 = vmatprep.subr.mxu0 %v225
    %874 = vmatpush1.msra.mxu0 %v224
    %875 = vmatprep.subr.mxu0 %v223
    %876 = vmatpush1.msra.mxu0 %v222
    %877 = vmatprep.subr.mxu0 0.0
    %878 = vmatpush2.msra.mxu0 0.0
    %879 = vmatprep.subr.mxu0 0.0
    %880 = vmatpush2.msra.mxu0 0.0
    %881 = vmatprep.subr.mxu0 0.0
    %882 = vmatpush2.msra.mxu0 0.0
    %883 = vmatprep.subr.mxu0 0.0
    %884 = vmatpush2.msra.mxu0 0.0
    %885 = vmatprep.subr.mxu0 0.0
    %886 = vmatpush2.msra.mxu0 0.0
    %887 = vmatprep.subr.mxu0 0.0
    %888 = vmatpush2.msra.mxu0 0.0
    %889 = vmatprep.subr.mxu0 0.0
    %890 = vmatpush2.msra.mxu0 0.0
    %891 = vmatprep.subr.mxu0 0.0
    %892 = vmatpush2.msra.mxu0 0.0
    %893 = vmatprep.subr.mxu0 0.0
    %894 = vmatpush2.msra.mxu0 0.0
    %895 = vmatprep.subr.mxu0 0.0
    %896 = vmatpush2.msra.mxu0 0.0
    %897 = vmatprep.subr.mxu0 0.0
    %898 = vmatpush2.msra.mxu0 0.0
    %899 = vmatprep.subr.mxu0 0.0
    %900 = vmatpush2.msra.mxu0 0.0
    %901 = vmatprep.subr.mxu0 0.0
    %902 = vmatpush2.msra.mxu0 0.0
    %903 = vmatprep.subr.mxu0 0.0
    %904 = vmatpush2.msra.mxu0 0.0
    %905 = vmatprep.subr.mxu0 0.0
    %906 = vmatpush2.msra.mxu0 0.0
    %907 = vmatprep.subr.mxu0 0.0
    %908 = vmatpush2.msra.mxu0 0.0
    %909 = vmatprep.mubr.f32.mxu0 0.0
    %910 = vmatmul.mubr.f32.gmra.mxu0 %v843
    %v911 = vpop.f32.mrf.mxu0
    %v912 = vadd.f32 0.0, %v911
    %v913 = vpop.f32.mrf.mxu0
    %v914 = vadd.f32 0.0, %v913
    %915 = vdwg.mxu0
    %v918 = vrot.slane %v912, 6
    %v919 = vrot.slane %v914, 6
    %v922 = vadd.f32 %v841, %v918
    %v923 = vadd.f32 %v842, %v919
    %v924 = vxor.u32 %v922, 2147483648
    %v925 = vmul.f32 %v924, 1.442695
    %v926 = vpow.pop %v925
    %v927 = vadd.f32 %v926, 1.0
    %v928 = vrcp.pop %v927
    %v929 = vmul.f32 1.0, %v928
    %v930 = vtanh.pop %v923
    %v931 = vxor.u32 %v923, 2147483648
    %v932 = vmul.f32 %v931, 1.442695
    %v933 = vpow.pop %v932
    %v934 = vadd.f32 %v933, 1.0
    %v935 = vrcp.pop %v934
    %v936 = vmul.f32 1.0, %v935
    %v938 = vrot.slane %v828, 6
    %v940 = vmul.f32 %v929, %v938
    %v941 = vmul.f32 %v929, %v930
    %943 = vrot.lane.b32.xlu0 %v941, 64
    %v944 = vpop.permute.xlu0 %943
    %v946 = vadd.f32 %v940, %v944
    %v947 = vtanh.pop %v946
    %v948 = vmul.f32 %v936, %v947
    %950 = vrot.lane.b32.xlu0 %v948, 64
    %v951 = vpop.permute.xlu0 %950
    %953 = vst.msk [vmem:[%s598 - $0x2] sm:$0xc] %vm477, %v951
    %954 = vst.msk [vmem:[%s595 - $0x2] sm:$0xc] %vm480, %v951
    %v955 = vrot.slane %v948, 2
    %956 = vrot.lane.b32.xlu0 %v955, 64
    %v957 = vpop.permute.xlu0 %956
    %v958 = vsel %vm248, %v957, 0
    %960 = vmatprep.subr.mxu0 0.0
    %961 = vmatpush1.msra.mxu0 0.0
    %962 = vmatprep.subr.mxu0 0.0
    %963 = vmatpush1.msra.mxu0 0.0
    %964 = vmatprep.subr.mxu0 0.0
    %965 = vmatpush1.msra.mxu0 0.0
    %966 = vmatprep.subr.mxu0 0.0
    %967 = vmatpush1.msra.mxu0 0.0
    %968 = vmatprep.subr.mxu0 0.0
    %969 = vmatpush1.msra.mxu0 0.0
    %970 = vmatprep.subr.mxu0 0.0
    %971 = vmatpush1.msra.mxu0 0.0
    %972 = vmatprep.subr.mxu0 0.0
    %973 = vmatpush1.msra.mxu0 0.0
    %974 = vmatprep.subr.mxu0 0.0
    %975 = vmatpush1.msra.mxu0 0.0
    %976 = vmatprep.subr.mxu0 %v237
    %977 = vmatpush1.msra.mxu0 %v236
    %978 = vmatprep.subr.mxu0 %v235
    %979 = vmatpush1.msra.mxu0 %v234
    %980 = vmatprep.subr.mxu0 %v233
    %981 = vmatpush1.msra.mxu0 %v232
    %982 = vmatprep.subr.mxu0 %v231
    %983 = vmatpush1.msra.mxu0 %v230
    %984 = vmatprep.subr.mxu0 %v229
    %985 = vmatpush1.msra.mxu0 %v228
    %986 = vmatprep.subr.mxu0 %v227
    %987 = vmatpush1.msra.mxu0 %v226
    %988 = vmatprep.subr.mxu0 %v225
    %989 = vmatpush1.msra.mxu0 %v224
    %990 = vmatprep.subr.mxu0 %v223
    %991 = vmatpush1.msra.mxu0 %v222
    %992 = vmatprep.subr.mxu0 0.0
    %993 = vmatpush2.msra.mxu0 0.0
    %994 = vmatprep.subr.mxu0 0.0
    %995 = vmatpush2.msra.mxu0 0.0
    %996 = vmatprep.subr.mxu0 0.0
    %997 = vmatpush2.msra.mxu0 0.0
    %998 = vmatprep.subr.mxu0 0.0
    %999 = vmatpush2.msra.mxu0 0.0
    %1000 = vmatprep.subr.mxu0 0.0
    %1001 = vmatpush2.msra.mxu0 0.0
    %1002 = vmatprep.subr.mxu0 0.0
    %1003 = vmatpush2.msra.mxu0 0.0
    %1004 = vmatprep.subr.mxu0 0.0
    %1005 = vmatpush2.msra.mxu0 0.0
    %1006 = vmatprep.subr.mxu0 0.0
    %1007 = vmatpush2.msra.mxu0 0.0
    %1008 = vmatprep.subr.mxu0 0.0
    %1009 = vmatpush2.msra.mxu0 0.0
    %1010 = vmatprep.subr.mxu0 0.0
    %1011 = vmatpush2.msra.mxu0 0.0
    %1012 = vmatprep.subr.mxu0 0.0
    %1013 = vmatpush2.msra.mxu0 0.0
    %1014 = vmatprep.subr.mxu0 0.0
    %1015 = vmatpush2.msra.mxu0 0.0
    %1016 = vmatprep.subr.mxu0 0.0
    %1017 = vmatpush2.msra.mxu0 0.0
    %1018 = vmatprep.subr.mxu0 0.0
    %1019 = vmatpush2.msra.mxu0 0.0
    %1020 = vmatprep.subr.mxu0 0.0
    %1021 = vmatpush2.msra.mxu0 0.0
    %1022 = vmatprep.subr.mxu0 0.0
    %1023 = vmatpush2.msra.mxu0 0.0
    %1024 = vmatprep.mubr.f32.mxu0 0.0
    %1025 = vmatmul.mubr.f32.gmra.mxu0 %v958
    %v1026 = vpop.f32.mrf.mxu0
    %v1027 = vadd.f32 0.0, %v1026
    %v1028 = vpop.f32.mrf.mxu0
    %v1029 = vadd.f32 0.0, %v1028
    %1030 = vdwg.mxu0
    %v1033 = vrot.slane %v1027, 4
    %v1034 = vrot.slane %v1029, 4
    %v1037 = vadd.f32 %v726, %v1033
    %v1038 = vadd.f32 %v727, %v1034
    %v1039 = vxor.u32 %v1037, 2147483648
    %v1040 = vmul.f32 %v1039, 1.442695
    %v1041 = vpow.pop %v1040
    %v1042 = vadd.f32 %v1041, 1.0
    %v1043 = vrcp.pop %v1042
    %v1044 = vmul.f32 1.0, %v1043
    %v1045 = vtanh.pop %v1038
    %v1046 = vxor.u32 %v1038, 2147483648
    %v1047 = vmul.f32 %v1046, 1.442695
    %v1048 = vpow.pop %v1047
    %v1049 = vadd.f32 %v1048, 1.0
    %v1050 = vrcp.pop %v1049
    %v1051 = vmul.f32 1.0, %v1050
    %v1053 = vrot.slane %v946, 6
    %v1055 = vmul.f32 %v1044, %v1053
    %v1056 = vmul.f32 %v1044, %v1045
    %1058 = vrot.lane.b32.xlu0 %v1056, 64
    %v1059 = vpop.permute.xlu0 %1058
    %v1061 = vadd.f32 %v1055, %v1059
    %v1062 = vtanh.pop %v1061
    %v1063 = vmul.f32 %v1051, %v1062
    %1065 = vrot.lane.b32.xlu0 %v1063, 64
    %v1066 = vpop.permute.xlu0 %1065
    %1068 = vst.msk [vmem:[%s479 - $0x4] sm:$0x30] %vm596, %v1066
    %1069 = vst.msk [vmem:[%s476 - $0x4] sm:$0x30] %vm599, %v1066
    %v1070 = vrot.slane %v1063, 4
    %1071 = vrot.lane.b32.xlu0 %v1070, 64
    %v1072 = vpop.permute.xlu0 %1071
    %v1073 = vsel %vm248, %v1072, 0
    %1075 = vmatprep.subr.mxu0 0.0
    %1076 = vmatpush1.msra.mxu0 0.0
    %1077 = vmatprep.subr.mxu0 0.0
    %1078 = vmatpush1.msra.mxu0 0.0
    %1079 = vmatprep.subr.mxu0 0.0
    %1080 = vmatpush1.msra.mxu0 0.0
    %1081 = vmatprep.subr.mxu0 0.0
    %1082 = vmatpush1.msra.mxu0 0.0
    %1083 = vmatprep.subr.mxu0 0.0
    %1084 = vmatpush1.msra.mxu0 0.0
    %1085 = vmatprep.subr.mxu0 0.0
    %1086 = vmatpush1.msra.mxu0 0.0
    %1087 = vmatprep.subr.mxu0 0.0
    %1088 = vmatpush1.msra.mxu0 0.0
    %1089 = vmatprep.subr.mxu0 0.0
    %1090 = vmatpush1.msra.mxu0 0.0
    %1091 = vmatprep.subr.mxu0 %v237
    %1092 = vmatpush1.msra.mxu0 %v236
    %1093 = vmatprep.subr.mxu0 %v235
    %1094 = vmatpush1.msra.mxu0 %v234
    %1095 = vmatprep.subr.mxu0 %v233
    %1096 = vmatpush1.msra.mxu0 %v232
    %1097 = vmatprep.subr.mxu0 %v231
    %1098 = vmatpush1.msra.mxu0 %v230
    %1099 = vmatprep.subr.mxu0 %v229
    %1100 = vmatpush1.msra.mxu0 %v228
    %1101 = vmatprep.subr.mxu0 %v227
    %1102 = vmatpush1.msra.mxu0 %v226
    %1103 = vmatprep.subr.mxu0 %v225
    %1104 = vmatpush1.msra.mxu0 %v224
    %1105 = vmatprep.subr.mxu0 %v223
    %1106 = vmatpush1.msra.mxu0 %v222
    %1107 = vmatprep.subr.mxu0 0.0
    %1108 = vmatpush2.msra.mxu0 0.0
    %1109 = vmatprep.subr.mxu0 0.0
    %1110 = vmatpush2.msra.mxu0 0.0
    %1111 = vmatprep.subr.mxu0 0.0
    %1112 = vmatpush2.msra.mxu0 0.0
    %1113 = vmatprep.subr.mxu0 0.0
    %1114 = vmatpush2.msra.mxu0 0.0
    %1115 = vmatprep.subr.mxu0 0.0
    %1116 = vmatpush2.msra.mxu0 0.0
    %1117 = vmatprep.subr.mxu0 0.0
    %1118 = vmatpush2.msra.mxu0 0.0
    %1119 = vmatprep.subr.mxu0 0.0
    %1120 = vmatpush2.msra.mxu0 0.0
    %1121 = vmatprep.subr.mxu0 0.0
    %1122 = vmatpush2.msra.mxu0 0.0
    %1123 = vmatprep.subr.mxu0 0.0
    %1124 = vmatpush2.msra.mxu0 0.0
    %1125 = vmatprep.subr.mxu0 0.0
    %1126 = vmatpush2.msra.mxu0 0.0
    %1127 = vmatprep.subr.mxu0 0.0
    %1128 = vmatpush2.msra.mxu0 0.0
    %1129 = vmatprep.subr.mxu0 0.0
    %1130 = vmatpush2.msra.mxu0 0.0
    %1131 = vmatprep.subr.mxu0 0.0
    %1132 = vmatpush2.msra.mxu0 0.0
    %1133 = vmatprep.subr.mxu0 0.0
    %1134 = vmatpush2.msra.mxu0 0.0
    %1135 = vmatprep.subr.mxu0 0.0
    %1136 = vmatpush2.msra.mxu0 0.0
    %1137 = vmatprep.subr.mxu0 0.0
    %1138 = vmatpush2.msra.mxu0 0.0
    %1139 = vmatprep.mubr.f32.mxu0 0.0
    %1140 = vmatmul.mubr.f32.gmra.mxu0 %v1073
    %v1141 = vpop.f32.mrf.mxu0
    %v1142 = vadd.f32 0.0, %v1141
    %v1143 = vpop.f32.mrf.mxu0
    %v1144 = vadd.f32 0.0, %v1143
    %1145 = vdwg.mxu0
    %v1148 = vrot.slane %v1142, 2
    %v1149 = vrot.slane %v1144, 2
    %v1152 = vadd.f32 %v841, %v1148
    %v1153 = vadd.f32 %v842, %v1149
    %v1154 = vxor.u32 %v1152, 2147483648
    %v1155 = vmul.f32 %v1154, 1.442695
    %v1156 = vpow.pop %v1155
    %v1157 = vadd.f32 %v1156, 1.0
    %v1158 = vrcp.pop %v1157
    %v1159 = vmul.f32 1.0, %v1158
    %v1160 = vtanh.pop %v1153
    %v1161 = vxor.u32 %v1153, 2147483648
    %v1162 = vmul.f32 %v1161, 1.442695
    %v1163 = vpow.pop %v1162
    %v1164 = vadd.f32 %v1163, 1.0
    %v1165 = vrcp.pop %v1164
    %v1166 = vmul.f32 1.0, %v1165
    %v1168 = vrot.slane %v1061, 6
    %v1170 = vmul.f32 %v1159, %v1168
    %v1171 = vmul.f32 %v1159, %v1160
    %1173 = vrot.lane.b32.xlu0 %v1171, 64
    %v1174 = vpop.permute.xlu0 %1173
    %v1176 = vadd.f32 %v1170, %v1174
    %v1177 = vtanh.pop %v1176
    %v1178 = vmul.f32 %v1166, %v1177
    %1180 = vrot.lane.b32.xlu0 %v1178, 64
    %v1181 = vpop.permute.xlu0 %1180
    %1183 = vst.msk [vmem:[%s357 - $0x6] sm:$0xc0] %vm715, %v1181
    %1184 = vst.msk [vmem:[%s7 - $0x6] sm:$0xc0] %vm718, %v1181
    %1185 = vst.msk [vmem:[#allocation2 - $0x6] sm:$0xc0] %vm715, %v1181
    %1186 = vrot.lane.b32.xlu0 %v1178, 32
    %v1187 = vpop.permute.xlu0 %1186
    %s1189 = scalar_lea.vmem [#allocation2], 2
    %1190 = vst.msk [vmem:[%s1189 - $0x6] sm:$0xc0] %vm715, %v1187
    %1192 = vrot.lane.b32.xlu0 %v1176, 64
    %v1193 = vpop.permute.xlu0 %1192
    %1195 = vst.msk [vmem:[#allocation4 - $0x6] sm:$0xc0] %vm715, %v1193
    %1196 = vrot.lane.b32.xlu0 %v1176, 32
    %v1197 = vpop.permute.xlu0 %1196
    %s1199 = scalar_lea.vmem [#allocation4], 2
    %1200 = vst.msk [vmem:[%s1199 - $0x6] sm:$0xc0] %vm715, %v1197
    // Predicated region
    $region30: #{nmt_decoder_la_forward.1} parent=1 // pred_check
      _
    $region31: #{nmt_decoder_la_forward.1} parent=1 // pred_check_branch
      %1202 = sbr.rel (0) target = $region33
    $region32: #{nmt_decoder_la_forward.1} parent=1 // pred_region
      _
    $region33: #{nmt_decoder_la_forward.1} parent=1 // pred_fallthru
      _
    // Predicated region
    $region34: #{nmt_decoder_la_forward.1} parent=1 // pred_check
      _
    $region35: #{nmt_decoder_la_forward.1} parent=1 // pred_check_branch
      %1204 = sbr.rel (0) target = $region37
    $region36: #{nmt_decoder_la_forward.1} parent=1 // pred_region
      %s1206 = ssub.s32 64, 64
      %1207 = vsyncadd [#allocation3], %s1206
      %s1208 = sshll.u32 [#allocation2], 4
      %s1209 = int_to_ptr.vmem [resolvable:$true] %s1208
      %1214 = dma.vmem_to_hbm [thread:$0]  %s1209, 64, %s8, [#allocation3], 32, 32, 2
    $region37: #{nmt_decoder_la_forward.1} parent=1 // pred_fallthru
      _
    // Predicated region
    $region38: #{nmt_decoder_la_forward.1} parent=1 // pred_check
      _
    $region39: #{nmt_decoder_la_forward.1} parent=1 // pred_check_branch
      %1216 = sbr.rel (0) target = $region41
    $region40: #{nmt_decoder_la_forward.1} parent=1 // pred_region
      %s1218 = ssub.s32 64, 64
      %1219 = vsyncadd [#allocation5], %s1218
      %s1220 = sshll.u32 [#allocation4], 4
      %s1221 = int_to_ptr.vmem [resolvable:$true] %s1220
      %1226 = dma.vmem_to_hbm [thread:$0]  %s1221, 64, %s9, [#allocation5], 32, 32, 2
    $region41: #{nmt_decoder_la_forward.1} parent=1 // pred_fallthru
      _
    // Predicated region
    $region42: #{nmt_decoder_la_forward.1} parent=1 // pred_check
      _
    $region43: #{nmt_decoder_la_forward.1} parent=1 // pred_check_branch
      %1228 = sbr.rel (0) target = $region45
    $region44: #{nmt_decoder_la_forward.1} parent=1 // pred_region
      _
    $region45: #{nmt_decoder_la_forward.1} parent=1 // pred_fallthru
      _
    // Predicated region
    $region46: #{nmt_decoder_la_forward.1} parent=1 // pred_check
      _
    $region47: #{nmt_decoder_la_forward.1} parent=1 // pred_check_branch
      %1230 = sbr.rel (0) target = $region49
    $region48: #{nmt_decoder_la_forward.1} parent=1 // pred_region
      %1231 = dma.done [#allocation3], 64
    $region49: #{nmt_decoder_la_forward.1} parent=1 // pred_fallthru
      _
    // Predicated region
    $region50: #{nmt_decoder_la_forward.1} parent=1 // pred_check
      _
    $region51: #{nmt_decoder_la_forward.1} parent=1 // pred_check_branch
      %1233 = sbr.rel (0) target = $region53
    $region52: #{nmt_decoder_la_forward.1} parent=1 // pred_region
      %1234 = dma.done [#allocation5], 64
    $region53: #{nmt_decoder_la_forward.1} parent=1 // pred_fallthru
      _
    %1235 = vsyncpa [#allocation3], 1
    %1236 = vsyncpa [#allocation5], 1

</llo_original>
